<compile_context>
chip_gen: v5e
topology: v5e:2x2
jax: 0.10.0
libtpu: 0.0.40
codegen_flags: <defaults>
</compile_context>

<pallas_src>
import functools

import numpy as np
import jax
import jax.numpy as jnp
from jax.experimental import pallas as pl
from jax.experimental.pallas import tpu as pltpu


def _vmem_spec():
    return pl.BlockSpec(memory_space=pltpu.MemorySpace.VMEM)


def _layer_norm(y, g, b, eps=1e-5):
    mu = jnp.mean(y, axis=-1, keepdims=True)
    var = jnp.mean(jnp.square(y - mu), axis=-1, keepdims=True)
    return (y - mu) * jax.lax.rsqrt(var + eps) * g + b


def _fiota(shape, dim):
    # float iota built from int32 iota (int iota is the safest Mosaic lowering)
    return jax.lax.broadcasted_iota(jnp.int32, shape, dim).astype(jnp.float32)


# ------------------------------ fused kernel --------------------------------

def fused_kernel(uni_in_ref, src_in_ref, xpos_ref, pos_tab_ref,
                 w_uni_ref, b_uni_ref, w_src_ref, b_src_ref,
                 wqkv_ref, bqkv_ref, wo_ref, bo_ref,
                 w1_ref, b1_ref, w2_ref, b2_ref, ln_ref,
                 uni_out_ref, mem_out_ref,
                 *, n_head, d_k, d_v, n_layers, batch, seq, n_pos):
    f32 = jnp.float32
    H, dk, dv = n_head, d_k, d_v
    B, S = batch, seq
    BS = B * S
    R = H * BS
    scale = f32(1.0 / float(np.sqrt(float(dk))))

    # --- three unimodal projections, packed as one block-diagonal matmul ---
    uni = jnp.dot(uni_in_ref[...], w_uni_ref[...],
                  preferred_element_type=f32) + b_uni_ref[...]
    uni_out_ref[...] = uni.astype(uni_out_ref.dtype)

    # --- source-feature projection + positional encoding ---
    x = jnp.dot(src_in_ref[...], w_src_ref[...],
                preferred_element_type=f32) + b_src_ref[...]
    # in-kernel embedding gather: one-hot(positions) @ sinusoid_table
    pos_onehot = (jax.lax.broadcasted_iota(jnp.int32, (BS, n_pos), 1)
                  == xpos_ref[...]).astype(f32)
    x = x + jnp.dot(pos_onehot, pos_tab_ref[...], preferred_element_type=f32)

    # --- constant selector / mask / pooling matrices, built once in VMEM from
    #     iotas (float-exact arithmetic; avoids 6 tiny HBM inputs + DMAs) ---
    inv_BS, inv_S = f32(1.0 / BS), f32(1.0 / S)
    jrow = _fiota((R, 1), 0)                       # replicated-row index j
    head_row = jnp.floor(jrow * inv_BS)            # j // BS  (head of row)
    pos_row = jrow - head_row * f32(BS)            # j %  BS  (key position)
    row_rep = (pos_row == _fiota((R, BS), 1)).astype(f32)            # (R, BS)
    mask_k = (jnp.floor(_fiota((R, H * dk), 1) * f32(1.0 / dk))
              == head_row).astype(f32)                               # (R, H*dk)
    mask_v = (jnp.floor(_fiota((R, H * dv), 1) * f32(1.0 / dv))
              == head_row).astype(f32)                               # (R, H*dv)
    seg_mat = (head_row ==
               jnp.floor(_fiota((R, R), 1) * inv_BS)).astype(f32)    # (R, R)
    q_batch = jnp.floor(_fiota((BS, R), 0) * inv_S)
    jc = _fiota((BS, R), 1)
    k_batch = jnp.floor((jc - jnp.floor(jc * inv_BS) * f32(BS)) * inv_S)
    attn_bias = jnp.where(q_batch == k_batch, 0.0, -1e30).astype(f32)  # (BS, R)
    pool = ((jnp.floor(_fiota((B, BS), 1) * inv_S) == _fiota((B, BS), 0))
            .astype(f32) * inv_S)                                    # (B, BS)

    for l in range(n_layers):       # static layer loop, x never leaves VMEM
        # packed QKV projection: one lane-dense matmul
        qkv = jnp.dot(x, wqkv_ref[l], preferred_element_type=f32) + bqkv_ref[l]
        q = qkv[:, :H * dk]                                          # (BS, H*dk)
        # replicate K|V rows once per head and mask to that head's columns
        kv_rep = jnp.dot(row_rep, qkv[:, H * dk:],
                         preferred_element_type=f32)                 # (R, H*(dk+dv))
        k_big = kv_rep[:, :H * dk] * mask_k                          # (R, H*dk)
        v_big = kv_rep[:, H * dk:] * mask_v                          # (R, H*dv)

        # all-head scores in one matmul:  s[bs_q, h*BS + bs_k] = q_h . k_h
        s = jax.lax.dot_general(q, k_big, (((1,), (1,)), ((), ())),
                                preferred_element_type=f32) * scale  # (BS, R)
        s = s + attn_bias
        s = s - jnp.max(s, axis=-1, keepdims=True)
        e = jnp.exp(s)
        # per-(query, head) softmax denominator via one constant matmul
        seg = jnp.dot(e, seg_mat, preferred_element_type=f32)
        p = e * pl.reciprocal(jnp.maximum(seg, f32(1e-30)), approx=True)

        att = jnp.dot(p, v_big, preferred_element_type=f32)          # (BS, H*dv)
        att = jnp.dot(att, wo_ref[l], preferred_element_type=f32) + bo_ref[l]

        ln = ln_ref[l]                                               # (4, D)
        h1 = _layer_norm(x + att, ln[0:1, :], ln[1:2, :])
        ff = jnp.maximum(
            jnp.dot(h1, w1_ref[l], preferred_element_type=f32) + b1_ref[l], 0.0)
        ff = jnp.dot(ff, w2_ref[l], preferred_element_type=f32) + b2_ref[l]
        x = _layer_norm(h1 + ff, ln[2:3, :], ln[3:4, :])

    # --- mean pool over the sequence via the constant pooling matmul ---
    mem_out_ref[...] = jnp.dot(pool, x,
                               preferred_element_type=f32).astype(mem_out_ref.dtype)


# ------------------------- host-side parameter setup -------------------------

def sinusoid_table(n_position, d_model):
    pos = np.arange(n_position)[:, None].astype(np.float64)
    i = np.arange(d_model)[None, :]
    angle = pos / np.power(10000.0, 2 * (i // 2) / d_model)
    tab = np.zeros((n_position, d_model), np.float32)
    tab[:, 0::2] = np.sin(angle[:, 0::2])
    tab[:, 1::2] = np.cos(angle[:, 1::2])
    tab[0, :] = 0.0                                   # padding idx
    return jnp.asarray(tab)


def init_params(key, cfg):
    nc = cfg['num_context_sequence']
    th, ah, vh = cfg['uni_hidden']
    out_t, out_a, out_v = cfg['mfn_h_dims']
    d_model, d_inner = cfg['d_model'], cfg['d_inner']
    n_head, d_k, d_v = cfg['n_head'], cfg['d_k'], cfg['d_v']
    L = cfg['n_layers']
    n_src = th + ah + vh

    def w(k, shape, scl=0.02):
        return jax.random.normal(k, shape, jnp.float32) * scl

    keys = jax.random.split(key, 8)
    # three unimodal Linears packed as one block-diagonal weight
    wt = w(keys[0], (nc * th, out_t))
    wa = w(keys[1], (nc * ah, out_a))
    wv_ = w(keys[2], (nc * vh, out_v))
    w_uni = jnp.zeros((nc * n_src, out_t + out_a + out_v), jnp.float32)
    w_uni = w_uni.at[:nc * th, :out_t].set(wt)
    w_uni = w_uni.at[nc * th:nc * (th + ah), out_t:out_t + out_a].set(wa)
    w_uni = w_uni.at[nc * (th + ah):, out_t + out_a:].set(wv_)
    b_uni = jnp.zeros((1, out_t + out_a + out_v), jnp.float32)

    w_src = w(keys[3], (n_src, d_model))
    b_src = jnp.zeros((1, d_model), jnp.float32)
    pos_table = sinusoid_table(cfg['max_seq_len'] + 1, d_model)

    wqkv, bqkv, wo, bo, w1, b1, w2, b2, ln = ([] for _ in range(9))
    for lk in jax.random.split(keys[4], L):
        ks = jax.random.split(lk, 6)
        wq = w(ks[0], (d_model, n_head * d_k))
        wk = w(ks[1], (d_model, n_head * d_k))
        wv2 = w(ks[2], (d_model, n_head * d_v))
        wqkv.append(jnp.concatenate([wq, wk, wv2], axis=1))
        bqkv.append(jnp.zeros((1, n_head * (2 * d_k + d_v)), jnp.float32))
        wo.append(w(ks[3], (n_head * d_v, d_model)))
        bo.append(jnp.zeros((1, d_model), jnp.float32))
        w1.append(w(ks[4], (d_model, d_inner)))
        b1.append(jnp.zeros((1, d_inner), jnp.float32))
        w2.append(w(ks[5], (d_inner, d_model)))
        b2.append(jnp.zeros((1, d_model), jnp.float32))
        ln.append(jnp.stack([jnp.ones(d_model), jnp.zeros(d_model),
                             jnp.ones(d_model), jnp.zeros(d_model)]).astype(jnp.float32))

    return dict(w_uni=w_uni, b_uni=b_uni, w_src=w_src, b_src=b_src,
                pos_table=pos_table,
                wqkv=jnp.stack(wqkv), bqkv=jnp.stack(bqkv),
                wo=jnp.stack(wo), bo=jnp.stack(bo),
                w1=jnp.stack(w1), b1=jnp.stack(b1),
                w2=jnp.stack(w2), b2=jnp.stack(b2),
                ln=jnp.stack(ln))


# ------------------------------ forward wrapper ------------------------------

def multimodal_context_forward(params, cfg, text_uni, audio_uni, video_uni,
                               X_pos_Context, Y):
    # TODO(synk): the reference Transformer class (and its use of Y / squeeze(0)
    # head) is not defined in the provided snippet; the encoder output is
    # mean-pooled over the sequence to produce the (B, d_model) mem-LSTM input.
    # TODO(synk): attention pad-masks derived from X_pos_Context are not applied
    # (all positions are non-padding in this setting); dropout = identity (eval).
    B, S = text_uni.shape[0], text_uni.shape[1]
    n_head, d_k, d_v, L = cfg['n_head'], cfg['d_k'], cfg['d_v'], cfg['n_layers']
    d_model = cfg['d_model']
    out_t, out_a, out_v = cfg['mfn_h_dims']
    n_pos = params['pos_table'].shape[0]

    # layout-only data prep feeding the single fused kernel
    uni_in = jnp.concatenate([text_uni.reshape(B, -1),
                              audio_uni.reshape(B, -1),
                              video_uni.reshape(B, -1)], axis=1)
    src_in = jnp.concatenate([text_uni, audio_uni, video_uni],
                             axis=2).reshape(B * S, -1)
    xpos = X_pos_Context.reshape(B * S, 1).astype(jnp.int32)

    kern = functools.partial(fused_kernel, n_head=n_head, d_k=d_k, d_v=d_v,
                             n_layers=L, batch=B, seq=S, n_pos=n_pos)
    args = (uni_in, src_in, xpos, params['pos_table'],
            params['w_uni'], params['b_uni'], params['w_src'], params['b_src'],
            params['wqkv'], params['bqkv'], params['wo'], params['bo'],
            params['w1'], params['b1'], params['w2'], params['b2'], params['ln'])

    uni_out, mem = pl.pallas_call(
        kern,
        out_shape=(jax.ShapeDtypeStruct((B, out_t + out_a + out_v), jnp.float32),
                   jax.ShapeDtypeStruct((B, d_model), jnp.float32)),
        in_specs=[_vmem_spec()] * len(args),
        out_specs=(_vmem_spec(), _vmem_spec()),
    )(*args)

    hl = uni_out[:, :out_t]
    ha = uni_out[:, out_t:out_t + out_a]
    hv = uni_out[:, out_t + out_a:]
    return hl, ha, hv, mem


# ------------------------------ NumPy reference ------------------------------

def numpy_reference(params, cfg, text, audio, video, X_pos):
    f = lambda a: np.asarray(a, np.float32)
    B, S = text.shape[0], text.shape[1]
    H, dk, dv, L = cfg['n_head'], cfg['d_k'], cfg['d_v'], cfg['n_layers']
    D = cfg['d_model']
    uni_in = np.concatenate([f(text).reshape(B, -1), f(audio).reshape(B, -1),
                             f(video).reshape(B, -1)], axis=1)
    uni = uni_in @ f(params['w_uni']) + f(params['b_uni'])
    src = np.concatenate([f(text), f(audio), f(video)], axis=2).reshape(B * S, -1)
    x = src @ f(params['w_src']) + f(params['b_src'])
    x = x + f(params['pos_table'])[np.asarray(X_pos)].reshape(B * S, D)

    def lnorm(y, g, b, eps=1e-5):
        mu = y.mean(-1, keepdims=True)
        var = ((y - mu) ** 2).mean(-1, keepdims=True)
        return (y - mu) / np.sqrt(var + eps) * g + b

    for l in range(L):
        qkv = x @ f(params['wqkv'][l]) + f(params['bqkv'][l])
        q, k, v = qkv[:, :H * dk], qkv[:, H * dk:2 * H * dk], qkv[:, 2 * H * dk:]
        att = np.zeros((B * S, H * dv), np.float32)
        for b in range(B):
            rows = slice(b * S, (b + 1) * S)
            for h in range(H):
                qh = q[rows, h * dk:(h + 1) * dk]
                kh = k[rows, h * dk:(h + 1) * dk]
                vh = v[rows, h * dv:(h + 1) * dv]
                s = qh @ kh.T / np.sqrt(dk)
                s = s - s.max(-1, keepdims=True)
                p_ = np.exp(s)
                p_ = p_ / p_.sum(-1, keepdims=True)
                att[rows, h * dv:(h + 1) * dv] = p_ @ vh
        att = att @ f(params['wo'][l]) + f(params['bo'][l])
        ln = f(params['ln'][l])
        h1 = lnorm(x + att, ln[0], ln[1])
        ffn = np.maximum(h1 @ f(params['w1'][l]) + f(params['b1'][l]), 0.0)
        ffn = ffn @ f(params['w2'][l]) + f(params['b2'][l])
        x = lnorm(h1 + ffn, ln[2], ln[3])
    mem = x.reshape(B, S, D).mean(axis=1)
    out_t, out_a, out_v = cfg['mfn_h_dims']
    return (uni[:, :out_t], uni[:, out_t:out_t + out_a],
            uni[:, out_t + out_a:], mem)


# ---------------------------------- main ------------------------------------

if __name__ == "__main__":
    cfg = dict(
        num_context_sequence=2,
        uni_hidden=(16, 8, 8),        # text / audio / video unimodal hidden sizes
        mfn_h_dims=(32, 16, 16),      # MFN h_dims (output dims of the three Linears)
        d_model=32, d_inner=64, n_head=4, d_k=8, d_v=8, n_layers=2,
        max_seq_len=2,
    )
    B, S = 2, cfg['num_context_sequence']
    th, ah, vh = cfg['uni_hidden']

    key = jax.random.PRNGKey(0)
    kp, kt, ka, kv = jax.random.split(key, 4)
    params = init_params(kp, cfg)

    text_uni = jax.random.normal(kt, (B, S, th), jnp.float32)
    audio_uni = jax.random.normal(ka, (B, S, ah), jnp.float32)
    video_uni = jax.random.normal(kv, (B, S, vh), jnp.float32)
    X_pos_Context = jnp.tile(jnp.arange(1, S + 1, dtype=jnp.int32)[None, :], (B, 1))
    Y = jnp.zeros((B,), jnp.int32)    # unused (see TODO in the wrapper)

    @jax.jit
    def fwd(p, t, a, v, xp, y):
        return multimodal_context_forward(p, cfg, t, a, v, xp, y)

    outs = fwd(params, text_uni, audio_uni, video_uni, X_pos_Context, Y)
    outs = jax.block_until_ready(outs)
    hl, ha, hv, mem = outs

    assert hl.shape == (B, cfg['mfn_h_dims'][0])
    assert ha.shape == (B, cfg['mfn_h_dims'][1])
    assert hv.shape == (B, cfg['mfn_h_dims'][2])
    assert mem.shape == (B, cfg['d_model'])
    assert all(bool(jnp.all(jnp.isfinite(o))) for o in outs)

    # correctness check against an independent per-head NumPy reference
    r_hl, r_ha, r_hv, r_mem = numpy_reference(params, cfg, text_uni, audio_uni,
                                              video_uni, X_pos_Context)
    np.testing.assert_allclose(np.asarray(hl), r_hl, rtol=5e-2, atol=5e-2)
    np.testing.assert_allclose(np.asarray(ha), r_ha, rtol=5e-2, atol=5e-2)
    np.testing.assert_allclose(np.asarray(hv), r_hv, rtol=5e-2, atol=5e-2)
    np.testing.assert_allclose(np.asarray(mem), r_mem, rtol=5e-2, atol=5e-2)

    print("KERNEL_OK")
</pallas_src>

<mosaic_0001>
module attributes {stable_mosaic.version = 11 : i64} {
  func.func @fused_kernel(%arg0: memref<2x64xf32, #tpu.memory_space<vmem>>, %arg1: memref<4x32xf32, #tpu.memory_space<vmem>>, %arg2: memref<4x1xi32, #tpu.memory_space<vmem>>, %arg3: memref<3x32xf32, #tpu.memory_space<vmem>>, %arg4: memref<64x64xf32, #tpu.memory_space<vmem>>, %arg5: memref<1x64xf32, #tpu.memory_space<vmem>>, %arg6: memref<32x32xf32, #tpu.memory_space<vmem>>, %arg7: memref<1x32xf32, #tpu.memory_space<vmem>>, %arg8: memref<2x32x96xf32, #tpu.memory_space<vmem>>, %arg9: memref<2x1x96xf32, #tpu.memory_space<vmem>>, %arg10: memref<2x32x32xf32, #tpu.memory_space<vmem>>, %arg11: memref<2x1x32xf32, #tpu.memory_space<vmem>>, %arg12: memref<2x32x64xf32, #tpu.memory_space<vmem>>, %arg13: memref<2x1x64xf32, #tpu.memory_space<vmem>>, %arg14: memref<2x64x32xf32, #tpu.memory_space<vmem>>, %arg15: memref<2x1x32xf32, #tpu.memory_space<vmem>>, %arg16: memref<2x4x32xf32, #tpu.memory_space<vmem>>, %arg17: memref<2x64xf32, #tpu.memory_space<vmem>>, %arg18: memref<2x32xf32, #tpu.memory_space<vmem>>) attributes {dimension_semantics = [], scalar_prefetch = 0 : i64, scratch_operands = 0 : i64, tpu.core_type = #tpu.core_type<tc>} {
    %c0 = arith.constant 0 : index
    %c0_0 = arith.constant 0 : index
    %0 = vector.load %arg0[%c0, %c0_0] : memref<2x64xf32, #tpu.memory_space<vmem>>, vector<2x64xf32>
    %c0_1 = arith.constant 0 : index
    %c0_2 = arith.constant 0 : index
    %1 = vector.load %arg4[%c0_1, %c0_2] : memref<64x64xf32, #tpu.memory_space<vmem>>, vector<64x64xf32>
    %cst = arith.constant dense<0.000000e+00> : vector<2x64xf32>
    %2 = tpu.matmul %0, %1, %cst {dimension_numbers = #tpu.dot_dimension_numbers<[1], [0], [0], [1], [0, 0, 1, 1], [], []>} : vector<2x64xf32>, vector<64x64xf32>, vector<2x64xf32> -> vector<2x64xf32>
    %c0_3 = arith.constant 0 : index
    %c0_4 = arith.constant 0 : index
    %3 = vector.load %arg5[%c0_3, %c0_4] : memref<1x64xf32, #tpu.memory_space<vmem>>, vector<1x64xf32>
    %4 = vector.broadcast %3 : vector<1x64xf32> to vector<2x64xf32>
    %5 = arith.addf %2, %4 : vector<2x64xf32>
    %c0_5 = arith.constant 0 : index
    %c0_6 = arith.constant 0 : index
    %6 = vector.load %arg17[%c0_5, %c0_6] : memref<2x64xf32, #tpu.memory_space<vmem>>, vector<2x64xf32>
    tpu.vector_store %arg17[%c0_5, %c0_6], %5 {strides = array<i32>} : memref<2x64xf32, #tpu.memory_space<vmem>>, vector<2x64xf32>,
    %c0_7 = arith.constant 0 : index
    %c0_8 = arith.constant 0 : index
    %7 = vector.load %arg1[%c0_7, %c0_8] : memref<4x32xf32, #tpu.memory_space<vmem>>, vector<4x32xf32>
    %c0_9 = arith.constant 0 : index
    %c0_10 = arith.constant 0 : index
    %8 = vector.load %arg6[%c0_9, %c0_10] : memref<32x32xf32, #tpu.memory_space<vmem>>, vector<32x32xf32>
    %cst_11 = arith.constant dense<0.000000e+00> : vector<4x32xf32>
    %9 = tpu.matmul %7, %8, %cst_11 {dimension_numbers = #tpu.dot_dimension_numbers<[1], [0], [0], [1], [0, 0, 1, 1], [], []>} : vector<4x32xf32>, vector<32x32xf32>, vector<4x32xf32> -> vector<4x32xf32>
    %c0_12 = arith.constant 0 : index
    %c0_13 = arith.constant 0 : index
    %10 = vector.load %arg7[%c0_12, %c0_13] : memref<1x32xf32, #tpu.memory_space<vmem>>, vector<1x32xf32>
    %11 = vector.broadcast %10 : vector<1x32xf32> to vector<4x32xf32>
    %12 = arith.addf %9, %11 : vector<4x32xf32>
    %13 = tpu.iota {dimensions = array<i32: 1>} : vector<4x3xi32>
    %c0_14 = arith.constant 0 : index
    %c0_15 = arith.constant 0 : index
    %14 = vector.load %arg2[%c0_14, %c0_15] : memref<4x1xi32, #tpu.memory_space<vmem>>, vector<4x1xi32>
    %15 = vector.broadcast %14 : vector<4x1xi32> to vector<4x3xi32>
    %16 = arith.cmpi eq, %13, %15 : vector<4x3xi32>
    %17 = arith.extui %16 : vector<4x3xi1> to vector<4x3xi32>
    %18 = arith.sitofp %17 : vector<4x3xi32> to vector<4x3xf32>
    %c0_16 = arith.constant 0 : index
    %c0_17 = arith.constant 0 : index
    %19 = vector.load %arg3[%c0_16, %c0_17] : memref<3x32xf32, #tpu.memory_space<vmem>>, vector<3x32xf32>
    %cst_18 = arith.constant dense<0.000000e+00> : vector<4x32xf32>
    %20 = tpu.matmul %18, %19, %cst_18 {dimension_numbers = #tpu.dot_dimension_numbers<[1], [0], [0], [1], [0, 0, 1, 1], [], []>} : vector<4x3xf32>, vector<3x32xf32>, vector<4x32xf32> -> vector<4x32xf32>
    %21 = arith.addf %12, %20 : vector<4x32xf32>
    %22 = tpu.iota {dimensions = array<i32: 0>} : vector<16x1xi32>
    %23 = arith.sitofp %22 : vector<16x1xi32> to vector<16x1xf32>
    %cst_19 = arith.constant 2.500000e-01 : f32
    %24 = vector.broadcast %cst_19 : f32 to vector<16x1xf32>
    %25 = arith.mulf %23, %24 : vector<16x1xf32>
    %26 = math.floor %25 : vector<16x1xf32>
    %cst_20 = arith.constant 4.000000e+00 : f32
    %27 = vector.broadcast %cst_20 : f32 to vector<16x1xf32>
    %28 = arith.mulf %26, %27 : vector<16x1xf32>
    %29 = arith.subf %23, %28 : vector<16x1xf32>
    %30 = tpu.iota {dimensions = array<i32: 1>} : vector<16x4xi32>
    %31 = arith.sitofp %30 : vector<16x4xi32> to vector<16x4xf32>
    %32 = vector.broadcast %29 : vector<16x1xf32> to vector<16x4xf32>
    %33 = arith.cmpf oeq, %32, %31 : vector<16x4xf32>
    %34 = arith.extui %33 : vector<16x4xi1> to vector<16x4xi32>
    %35 = arith.sitofp %34 : vector<16x4xi32> to vector<16x4xf32>
    %36 = tpu.iota {dimensions = array<i32: 1>} : vector<16x32xi32>
    %37 = arith.sitofp %36 : vector<16x32xi32> to vector<16x32xf32>
    %cst_21 = arith.constant 1.250000e-01 : f32
    %38 = vector.broadcast %cst_21 : f32 to vector<16x32xf32>
    %39 = arith.mulf %37, %38 : vector<16x32xf32>
    %40 = math.floor %39 : vector<16x32xf32>
    %41 = vector.broadcast %26 : vector<16x1xf32> to vector<16x32xf32>
    %42 = arith.cmpf oeq, %40, %41 : vector<16x32xf32>
    %43 = arith.extui %42 : vector<16x32xi1> to vector<16x32xi32>
    %44 = arith.sitofp %43 : vector<16x32xi32> to vector<16x32xf32>
    %45 = tpu.iota {dimensions = array<i32: 1>} : vector<16x32xi32>
    %46 = arith.sitofp %45 : vector<16x32xi32> to vector<16x32xf32>
    %cst_22 = arith.constant 1.250000e-01 : f32
    %47 = vector.broadcast %cst_22 : f32 to vector<16x32xf32>
    %48 = arith.mulf %46, %47 : vector<16x32xf32>
    %49 = math.floor %48 : vector<16x32xf32>
    %50 = vector.broadcast %26 : vector<16x1xf32> to vector<16x32xf32>
    %51 = arith.cmpf oeq, %49, %50 : vector<16x32xf32>
    %52 = arith.extui %51 : vector<16x32xi1> to vector<16x32xi32>
    %53 = arith.sitofp %52 : vector<16x32xi32> to vector<16x32xf32>
    %54 = tpu.iota {dimensions = array<i32: 1>} : vector<16x16xi32>
    %55 = arith.sitofp %54 : vector<16x16xi32> to vector<16x16xf32>
    %cst_23 = arith.constant 2.500000e-01 : f32
    %56 = vector.broadcast %cst_23 : f32 to vector<16x16xf32>
    %57 = arith.mulf %55, %56 : vector<16x16xf32>
    %58 = math.floor %57 : vector<16x16xf32>
    %59 = vector.broadcast %26 : vector<16x1xf32> to vector<16x16xf32>
    %60 = arith.cmpf oeq, %59, %58 : vector<16x16xf32>
    %61 = arith.extui %60 : vector<16x16xi1> to vector<16x16xi32>
    %62 = arith.sitofp %61 : vector<16x16xi32> to vector<16x16xf32>
    %63 = tpu.iota {dimensions = array<i32: 0>} : vector<4x16xi32>
    %64 = arith.sitofp %63 : vector<4x16xi32> to vector<4x16xf32>
    %cst_24 = arith.constant 5.000000e-01 : f32
    %65 = vector.broadcast %cst_24 : f32 to vector<4x16xf32>
    %66 = arith.mulf %64, %65 : vector<4x16xf32>
    %67 = math.floor %66 : vector<4x16xf32>
    %68 = tpu.iota {dimensions = array<i32: 1>} : vector<4x16xi32>
    %69 = arith.sitofp %68 : vector<4x16xi32> to vector<4x16xf32>
    %cst_25 = arith.constant 2.500000e-01 : f32
    %70 = vector.broadcast %cst_25 : f32 to vector<4x16xf32>
    %71 = arith.mulf %69, %70 : vector<4x16xf32>
    %72 = math.floor %71 : vector<4x16xf32>
    %cst_26 = arith.constant 4.000000e+00 : f32
    %73 = vector.broadcast %cst_26 : f32 to vector<4x16xf32>
    %74 = arith.mulf %72, %73 : vector<4x16xf32>
    %75 = arith.subf %69, %74 : vector<4x16xf32>
    %cst_27 = arith.constant 5.000000e-01 : f32
    %76 = vector.broadcast %cst_27 : f32 to vector<4x16xf32>
    %77 = arith.mulf %75, %76 : vector<4x16xf32>
    %78 = math.floor %77 : vector<4x16xf32>
    %79 = arith.cmpf oeq, %67, %78 : vector<4x16xf32>
    %cst_28 = arith.constant 0.000000e+00 : f32
    %cst_29 = arith.constant -1.000000e+30 : f32
    %80 = vector.broadcast %cst_28 : f32 to vector<4x16xf32>
    %81 = vector.broadcast %cst_29 : f32 to vector<4x16xf32>
    %82 = arith.select %79, %80, %81 : vector<4x16xi1>, vector<4x16xf32>
    %83 = tpu.iota {dimensions = array<i32: 1>} : vector<2x4xi32>
    %84 = arith.sitofp %83 : vector<2x4xi32> to vector<2x4xf32>
    %cst_30 = arith.constant 5.000000e-01 : f32
    %85 = vector.broadcast %cst_30 : f32 to vector<2x4xf32>
    %86 = arith.mulf %84, %85 : vector<2x4xf32>
    %87 = math.floor %86 : vector<2x4xf32>
    %88 = tpu.iota {dimensions = array<i32: 0>} : vector<2x4xi32>
    %89 = arith.sitofp %88 : vector<2x4xi32> to vector<2x4xf32>
    %90 = arith.cmpf oeq, %87, %89 : vector<2x4xf32>
    %91 = arith.extui %90 : vector<2x4xi1> to vector<2x4xi32>
    %92 = arith.sitofp %91 : vector<2x4xi32> to vector<2x4xf32>
    %cst_31 = arith.constant 5.000000e-01 : f32
    %93 = vector.broadcast %cst_31 : f32 to vector<2x4xf32>
    %94 = arith.mulf %92, %93 : vector<2x4xf32>
    %c0_32 = arith.constant 0 : index
    %c0_33 = arith.constant 0 : index
    %c0_34 = arith.constant 0 : index
    %95 = vector.load %arg8[%c0_32, %c0_33, %c0_34] : memref<2x32x96xf32, #tpu.memory_space<vmem>>, vector<1x32x96xf32>
    %96 = vector.shape_cast %95 : vector<1x32x96xf32> to vector<32x96xf32>
    %cst_35 = arith.constant dense<0.000000e+00> : vector<4x96xf32>
    %97 = tpu.matmul %21, %96, %cst_35 {dimension_numbers = #tpu.dot_dimension_numbers<[1], [0], [0], [1], [0, 0, 1, 1], [], []>} : vector<4x32xf32>, vector<32x96xf32>, vector<4x96xf32> -> vector<4x96xf32>
    %c0_36 = arith.constant 0 : index
    %c0_37 = arith.constant 0 : index
    %c0_38 = arith.constant 0 : index
    %98 = vector.load %arg9[%c0_36, %c0_37, %c0_38] : memref<2x1x96xf32, #tpu.memory_space<vmem>>, vector<1x1x96xf32>
    %99 = vector.shape_cast %98 : vector<1x1x96xf32> to vector<1x96xf32>
    %100 = vector.broadcast %99 : vector<1x96xf32> to vector<4x96xf32>
    %101 = arith.addf %97, %100 : vector<4x96xf32>
    %102 = vector.extract_strided_slice %101 {offsets = [0, 0], sizes = [4, 32], strides = [1, 1]} : vector<4x96xf32> to vector<4x32xf32>
    %103 = vector.extract_strided_slice %101 {offsets = [0, 32], sizes = [4, 64], strides = [1, 1]} : vector<4x96xf32> to vector<4x64xf32>
    %cst_39 = arith.constant dense<0.000000e+00> : vector<16x64xf32>
    %104 = tpu.matmul %35, %103, %cst_39 {dimension_numbers = #tpu.dot_dimension_numbers<[1], [0], [0], [1], [0, 0, 1, 1], [], []>} : vector<16x4xf32>, vector<4x64xf32>, vector<16x64xf32> -> vector<16x64xf32>
    %105 = vector.extract_strided_slice %104 {offsets = [0, 0], sizes = [16, 32], strides = [1, 1]} : vector<16x64xf32> to vector<16x32xf32>
    %106 = arith.mulf %105, %44 : vector<16x32xf32>
    %107 = vector.extract_strided_slice %104 {offsets = [0, 32], sizes = [16, 32], strides = [1, 1]} : vector<16x64xf32> to vector<16x32xf32>
    %108 = arith.mulf %107, %53 : vector<16x32xf32>
    %cst_40 = arith.constant dense<0.000000e+00> : vector<4x16xf32>
    %109 = tpu.matmul %102, %106, %cst_40 {dimension_numbers = #tpu.dot_dimension_numbers<[1], [1], [0], [0], [0, 0, 1, 0], [], []>} : vector<4x32xf32>, vector<16x32xf32>, vector<4x16xf32> -> vector<4x16xf32>
    %cst_41 = arith.constant 0.353553385 : f32
    %110 = vector.broadcast %cst_41 : f32 to vector<4x16xf32>
    %111 = arith.mulf %109, %110 : vector<4x16xf32>
    %112 = arith.addf %111, %82 : vector<4x16xf32>
    %cst_42 = arith.constant dense<0xFF800000> : vector<4xf32>
    %113 = vector.multi_reduction <maximumf>, %112, %cst_42 [1] : vector<4x16xf32> to vector<4xf32>
    %114 = vector.shape_cast %113 : vector<4xf32> to vector<4x1xf32>
    %115 = vector.broadcast %114 : vector<4x1xf32> to vector<4x16xf32>
    %116 = arith.subf %112, %115 : vector<4x16xf32>
    %117 = math.exp %116 : vector<4x16xf32>
    %cst_43 = arith.constant dense<0.000000e+00> : vector<4x16xf32>
    %118 = tpu.matmul %117, %62, %cst_43 {dimension_numbers = #tpu.dot_dimension_numbers<[1], [0], [0], [1], [0, 0, 1, 1], [], []>} : vector<4x16xf32>, vector<16x16xf32>, vector<4x16xf32> -> vector<4x16xf32>
    %cst_44 = arith.constant 1.000000e-30 : f32
    %119 = vector.broadcast %cst_44 : f32 to vector<4x16xf32>
    %120 = arith.maximumf %118, %119 : vector<4x16xf32>
    %121 = tpu.reciprocal %120 {approx = true} : vector<4x16xf32> -> vector<4x16xf32>
    %122 = arith.mulf %117, %121 : vector<4x16xf32>
    %cst_45 = arith.constant dense<0.000000e+00> : vector<4x32xf32>
    %123 = tpu.matmul %122, %108, %cst_45 {dimension_numbers = #tpu.dot_dimension_numbers<[1], [0], [0], [1], [0, 0, 1, 1], [], []>} : vector<4x16xf32>, vector<16x32xf32>, vector<4x32xf32> -> vector<4x32xf32>
    %c0_46 = arith.constant 0 : index
    %c0_47 = arith.constant 0 : index
    %c0_48 = arith.constant 0 : index
    %124 = vector.load %arg10[%c0_46, %c0_47, %c0_48] : memref<2x32x32xf32, #tpu.memory_space<vmem>>, vector<1x32x32xf32>
    %125 = vector.shape_cast %124 : vector<1x32x32xf32> to vector<32x32xf32>
    %cst_49 = arith.constant dense<0.000000e+00> : vector<4x32xf32>
    %126 = tpu.matmul %123, %125, %cst_49 {dimension_numbers = #tpu.dot_dimension_numbers<[1], [0], [0], [1], [0, 0, 1, 1], [], []>} : vector<4x32xf32>, vector<32x32xf32>, vector<4x32xf32> -> vector<4x32xf32>
    %c0_50 = arith.constant 0 : index
    %c0_51 = arith.constant 0 : index
    %c0_52 = arith.constant 0 : index
    %127 = vector.load %arg11[%c0_50, %c0_51, %c0_52] : memref<2x1x32xf32, #tpu.memory_space<vmem>>, vector<1x1x32xf32>
    %128 = vector.shape_cast %127 : vector<1x1x32xf32> to vector<1x32xf32>
    %129 = vector.broadcast %128 : vector<1x32xf32> to vector<4x32xf32>
    %130 = arith.addf %126, %129 : vector<4x32xf32>
    %c0_53 = arith.constant 0 : index
    %c0_54 = arith.constant 0 : index
    %c0_55 = arith.constant 0 : index
    %131 = vector.load %arg16[%c0_53, %c0_54, %c0_55] : memref<2x4x32xf32, #tpu.memory_space<vmem>>, vector<1x4x32xf32>
    %132 = vector.shape_cast %131 : vector<1x4x32xf32> to vector<4x32xf32>
    %133 = arith.addf %21, %130 : vector<4x32xf32>
    %134 = vector.extract_strided_slice %132 {offsets = [0, 0], sizes = [1, 32], strides = [1, 1]} : vector<4x32xf32> to vector<1x32xf32>
    %135 = vector.extract_strided_slice %132 {offsets = [1, 0], sizes = [1, 32], strides = [1, 1]} : vector<4x32xf32> to vector<1x32xf32>
    %cst_56 = arith.constant dense<0.000000e+00> : vector<4xf32>
    %136 = vector.multi_reduction <add>, %133, %cst_56 [1] : vector<4x32xf32> to vector<4xf32>
    %137 = vector.shape_cast %136 : vector<4xf32> to vector<4x1xf32>
    %cst_57 = arith.constant 3.200000e+01 : f32
    %138 = vector.broadcast %cst_57 : f32 to vector<4x1xf32>
    %139 = arith.divf %137, %138 : vector<4x1xf32>
    %140 = vector.broadcast %139 : vector<4x1xf32> to vector<4x32xf32>
    %141 = arith.subf %133, %140 : vector<4x32xf32>
    %142 = arith.mulf %141, %141 : vector<4x32xf32>
    %cst_58 = arith.constant dense<0.000000e+00> : vector<4xf32>
    %143 = vector.multi_reduction <add>, %142, %cst_58 [1] : vector<4x32xf32> to vector<4xf32>
    %144 = vector.shape_cast %143 : vector<4xf32> to vector<4x1xf32>
    %cst_59 = arith.constant 3.200000e+01 : f32
    %145 = vector.broadcast %cst_59 : f32 to vector<4x1xf32>
    %146 = arith.divf %144, %145 : vector<4x1xf32>
    %147 = vector.broadcast %139 : vector<4x1xf32> to vector<4x32xf32>
    %148 = arith.subf %133, %147 : vector<4x32xf32>
    %cst_60 = arith.constant 9.99999974E-6 : f32
    %149 = vector.broadcast %cst_60 : f32 to vector<4x1xf32>
    %150 = arith.addf %146, %149 : vector<4x1xf32>
    %151 = math.rsqrt %150 : vector<4x1xf32>
    %152 = vector.broadcast %151 : vector<4x1xf32> to vector<4x32xf32>
    %153 = arith.mulf %148, %152 : vector<4x32xf32>
    %154 = vector.broadcast %134 : vector<1x32xf32> to vector<4x32xf32>
    %155 = arith.mulf %153, %154 : vector<4x32xf32>
    %156 = vector.broadcast %135 : vector<1x32xf32> to vector<4x32xf32>
    %157 = arith.addf %155, %156 : vector<4x32xf32>
    %c0_61 = arith.constant 0 : index
    %c0_62 = arith.constant 0 : index
    %c0_63 = arith.constant 0 : index
    %158 = vector.load %arg12[%c0_61, %c0_62, %c0_63] : memref<2x32x64xf32, #tpu.memory_space<vmem>>, vector<1x32x64xf32>
    %159 = vector.shape_cast %158 : vector<1x32x64xf32> to vector<32x64xf32>
    %cst_64 = arith.constant dense<0.000000e+00> : vector<4x64xf32>
    %160 = tpu.matmul %157, %159, %cst_64 {dimension_numbers = #tpu.dot_dimension_numbers<[1], [0], [0], [1], [0, 0, 1, 1], [], []>} : vector<4x32xf32>, vector<32x64xf32>, vector<4x64xf32> -> vector<4x64xf32>
    %c0_65 = arith.constant 0 : index
    %c0_66 = arith.constant 0 : index
    %c0_67 = arith.constant 0 : index
    %161 = vector.load %arg13[%c0_65, %c0_66, %c0_67] : memref<2x1x64xf32, #tpu.memory_space<vmem>>, vector<1x1x64xf32>
    %162 = vector.shape_cast %161 : vector<1x1x64xf32> to vector<1x64xf32>
    %163 = vector.broadcast %162 : vector<1x64xf32> to vector<4x64xf32>
    %164 = arith.addf %160, %163 : vector<4x64xf32>
    %cst_68 = arith.constant 0.000000e+00 : f32
    %165 = vector.broadcast %cst_68 : f32 to vector<4x64xf32>
    %166 = arith.maximumf %164, %165 : vector<4x64xf32>
    %c0_69 = arith.constant 0 : index
    %c0_70 = arith.constant 0 : index
    %c0_71 = arith.constant 0 : index
    %167 = vector.load %arg14[%c0_69, %c0_70, %c0_71] : memref<2x64x32xf32, #tpu.memory_space<vmem>>, vector<1x64x32xf32>
    %168 = vector.shape_cast %167 : vector<1x64x32xf32> to vector<64x32xf32>
    %cst_72 = arith.constant dense<0.000000e+00> : vector<4x32xf32>
    %169 = tpu.matmul %166, %168, %cst_72 {dimension_numbers = #tpu.dot_dimension_numbers<[1], [0], [0], [1], [0, 0, 1, 1], [], []>} : vector<4x64xf32>, vector<64x32xf32>, vector<4x32xf32> -> vector<4x32xf32>
    %c0_73 = arith.constant 0 : index
    %c0_74 = arith.constant 0 : index
    %c0_75 = arith.constant 0 : index
    %170 = vector.load %arg15[%c0_73, %c0_74, %c0_75] : memref<2x1x32xf32, #tpu.memory_space<vmem>>, vector<1x1x32xf32>
    %171 = vector.shape_cast %170 : vector<1x1x32xf32> to vector<1x32xf32>
    %172 = vector.broadcast %171 : vector<1x32xf32> to vector<4x32xf32>
    %173 = arith.addf %169, %172 : vector<4x32xf32>
    %174 = arith.addf %157, %173 : vector<4x32xf32>
    %175 = vector.extract_strided_slice %132 {offsets = [2, 0], sizes = [1, 32], strides = [1, 1]} : vector<4x32xf32> to vector<1x32xf32>
    %176 = vector.extract_strided_slice %132 {offsets = [3, 0], sizes = [1, 32], strides = [1, 1]} : vector<4x32xf32> to vector<1x32xf32>
    %cst_76 = arith.constant dense<0.000000e+00> : vector<4xf32>
    %177 = vector.multi_reduction <add>, %174, %cst_76 [1] : vector<4x32xf32> to vector<4xf32>
    %178 = vector.shape_cast %177 : vector<4xf32> to vector<4x1xf32>
    %cst_77 = arith.constant 3.200000e+01 : f32
    %179 = vector.broadcast %cst_77 : f32 to vector<4x1xf32>
    %180 = arith.divf %178, %179 : vector<4x1xf32>
    %181 = vector.broadcast %180 : vector<4x1xf32> to vector<4x32xf32>
    %182 = arith.subf %174, %181 : vector<4x32xf32>
    %183 = arith.mulf %182, %182 : vector<4x32xf32>
    %cst_78 = arith.constant dense<0.000000e+00> : vector<4xf32>
    %184 = vector.multi_reduction <add>, %183, %cst_78 [1] : vector<4x32xf32> to vector<4xf32>
    %185 = vector.shape_cast %184 : vector<4xf32> to vector<4x1xf32>
    %cst_79 = arith.constant 3.200000e+01 : f32
    %186 = vector.broadcast %cst_79 : f32 to vector<4x1xf32>
    %187 = arith.divf %185, %186 : vector<4x1xf32>
    %188 = vector.broadcast %180 : vector<4x1xf32> to vector<4x32xf32>
    %189 = arith.subf %174, %188 : vector<4x32xf32>
    %cst_80 = arith.constant 9.99999974E-6 : f32
    %190 = vector.broadcast %cst_80 : f32 to vector<4x1xf32>
    %191 = arith.addf %187, %190 : vector<4x1xf32>
    %192 = math.rsqrt %191 : vector<4x1xf32>
    %193 = vector.broadcast %192 : vector<4x1xf32> to vector<4x32xf32>
    %194 = arith.mulf %189, %193 : vector<4x32xf32>
    %195 = vector.broadcast %175 : vector<1x32xf32> to vector<4x32xf32>
    %196 = arith.mulf %194, %195 : vector<4x32xf32>
    %197 = vector.broadcast %176 : vector<1x32xf32> to vector<4x32xf32>
    %198 = arith.addf %196, %197 : vector<4x32xf32>
    %c1 = arith.constant 1 : index
    %c0_81 = arith.constant 0 : index
    %c0_82 = arith.constant 0 : index
    %199 = vector.load %arg8[%c1, %c0_81, %c0_82] : memref<2x32x96xf32, #tpu.memory_space<vmem>>, vector<1x32x96xf32>
    %200 = vector.shape_cast %199 : vector<1x32x96xf32> to vector<32x96xf32>
    %cst_83 = arith.constant dense<0.000000e+00> : vector<4x96xf32>
    %201 = tpu.matmul %198, %200, %cst_83 {dimension_numbers = #tpu.dot_dimension_numbers<[1], [0], [0], [1], [0, 0, 1, 1], [], []>} : vector<4x32xf32>, vector<32x96xf32>, vector<4x96xf32> -> vector<4x96xf32>
    %c1_84 = arith.constant 1 : index
    %c0_85 = arith.constant 0 : index
    %c0_86 = arith.constant 0 : index
    %202 = vector.load %arg9[%c1_84, %c0_85, %c0_86] : memref<2x1x96xf32, #tpu.memory_space<vmem>>, vector<1x1x96xf32>
    %203 = vector.shape_cast %202 : vector<1x1x96xf32> to vector<1x96xf32>
    %204 = vector.broadcast %203 : vector<1x96xf32> to vector<4x96xf32>
    %205 = arith.addf %201, %204 : vector<4x96xf32>
    %206 = vector.extract_strided_slice %205 {offsets = [0, 0], sizes = [4, 32], strides = [1, 1]} : vector<4x96xf32> to vector<4x32xf32>
    %207 = vector.extract_strided_slice %205 {offsets = [0, 32], sizes = [4, 64], strides = [1, 1]} : vector<4x96xf32> to vector<4x64xf32>
    %cst_87 = arith.constant dense<0.000000e+00> : vector<16x64xf32>
    %208 = tpu.matmul %35, %207, %cst_87 {dimension_numbers = #tpu.dot_dimension_numbers<[1], [0], [0], [1], [0, 0, 1, 1], [], []>} : vector<16x4xf32>, vector<4x64xf32>, vector<16x64xf32> -> vector<16x64xf32>
    %209 = vector.extract_strided_slice %208 {offsets = [0, 0], sizes = [16, 32], strides = [1, 1]} : vector<16x64xf32> to vector<16x32xf32>
    %210 = arith.mulf %209, %44 : vector<16x32xf32>
    %211 = vector.extract_strided_slice %208 {offsets = [0, 32], sizes = [16, 32], strides = [1, 1]} : vector<16x64xf32> to vector<16x32xf32>
    %212 = arith.mulf %211, %53 : vector<16x32xf32>
    %cst_88 = arith.constant dense<0.000000e+00> : vector<4x16xf32>
    %213 = tpu.matmul %206, %210, %cst_88 {dimension_numbers = #tpu.dot_dimension_numbers<[1], [1], [0], [0], [0, 0, 1, 0], [], []>} : vector<4x32xf32>, vector<16x32xf32>, vector<4x16xf32> -> vector<4x16xf32>
    %cst_89 = arith.constant 0.353553385 : f32
    %214 = vector.broadcast %cst_89 : f32 to vector<4x16xf32>
    %215 = arith.mulf %213, %214 : vector<4x16xf32>
    %216 = arith.addf %215, %82 : vector<4x16xf32>
    %cst_90 = arith.constant dense<0xFF800000> : vector<4xf32>
    %217 = vector.multi_reduction <maximumf>, %216, %cst_90 [1] : vector<4x16xf32> to vector<4xf32>
    %218 = vector.shape_cast %217 : vector<4xf32> to vector<4x1xf32>
    %219 = vector.broadcast %218 : vector<4x1xf32> to vector<4x16xf32>
    %220 = arith.subf %216, %219 : vector<4x16xf32>
    %221 = math.exp %220 : vector<4x16xf32>
    %cst_91 = arith.constant dense<0.000000e+00> : vector<4x16xf32>
    %222 = tpu.matmul %221, %62, %cst_91 {dimension_numbers = #tpu.dot_dimension_numbers<[1], [0], [0], [1], [0, 0, 1, 1], [], []>} : vector<4x16xf32>, vector<16x16xf32>, vector<4x16xf32> -> vector<4x16xf32>
    %cst_92 = arith.constant 1.000000e-30 : f32
    %223 = vector.broadcast %cst_92 : f32 to vector<4x16xf32>
    %224 = arith.maximumf %222, %223 : vector<4x16xf32>
    %225 = tpu.reciprocal %224 {approx = true} : vector<4x16xf32> -> vector<4x16xf32>
    %226 = arith.mulf %221, %225 : vector<4x16xf32>
    %cst_93 = arith.constant dense<0.000000e+00> : vector<4x32xf32>
    %227 = tpu.matmul %226, %212, %cst_93 {dimension_numbers = #tpu.dot_dimension_numbers<[1], [0], [0], [1], [0, 0, 1, 1], [], []>} : vector<4x16xf32>, vector<16x32xf32>, vector<4x32xf32> -> vector<4x32xf32>
    %c1_94 = arith.constant 1 : index
    %c0_95 = arith.constant 0 : index
    %c0_96 = arith.constant 0 : index
    %228 = vector.load %arg10[%c1_94, %c0_95, %c0_96] : memref<2x32x32xf32, #tpu.memory_space<vmem>>, vector<1x32x32xf32>
    %229 = vector.shape_cast %228 : vector<1x32x32xf32> to vector<32x32xf32>
    %cst_97 = arith.constant dense<0.000000e+00> : vector<4x32xf32>
    %230 = tpu.matmul %227, %229, %cst_97 {dimension_numbers = #tpu.dot_dimension_numbers<[1], [0], [0], [1], [0, 0, 1, 1], [], []>} : vector<4x32xf32>, vector<32x32xf32>, vector<4x32xf32> -> vector<4x32xf32>
    %c1_98 = arith.constant 1 : index
    %c0_99 = arith.constant 0 : index
    %c0_100 = arith.constant 0 : index
    %231 = vector.load %arg11[%c1_98, %c0_99, %c0_100] : memref<2x1x32xf32, #tpu.memory_space<vmem>>, vector<1x1x32xf32>
    %232 = vector.shape_cast %231 : vector<1x1x32xf32> to vector<1x32xf32>
    %233 = vector.broadcast %232 : vector<1x32xf32> to vector<4x32xf32>
    %234 = arith.addf %230, %233 : vector<4x32xf32>
    %c1_101 = arith.constant 1 : index
    %c0_102 = arith.constant 0 : index
    %c0_103 = arith.constant 0 : index
    %235 = vector.load %arg16[%c1_101, %c0_102, %c0_103] : memref<2x4x32xf32, #tpu.memory_space<vmem>>, vector<1x4x32xf32>
    %236 = vector.shape_cast %235 : vector<1x4x32xf32> to vector<4x32xf32>
    %237 = arith.addf %198, %234 : vector<4x32xf32>
    %238 = vector.extract_strided_slice %236 {offsets = [0, 0], sizes = [1, 32], strides = [1, 1]} : vector<4x32xf32> to vector<1x32xf32>
    %239 = vector.extract_strided_slice %236 {offsets = [1, 0], sizes = [1, 32], strides = [1, 1]} : vector<4x32xf32> to vector<1x32xf32>
    %cst_104 = arith.constant dense<0.000000e+00> : vector<4xf32>
    %240 = vector.multi_reduction <add>, %237, %cst_104 [1] : vector<4x32xf32> to vector<4xf32>
    %241 = vector.shape_cast %240 : vector<4xf32> to vector<4x1xf32>
    %cst_105 = arith.constant 3.200000e+01 : f32
    %242 = vector.broadcast %cst_105 : f32 to vector<4x1xf32>
    %243 = arith.divf %241, %242 : vector<4x1xf32>
    %244 = vector.broadcast %243 : vector<4x1xf32> to vector<4x32xf32>
    %245 = arith.subf %237, %244 : vector<4x32xf32>
    %246 = arith.mulf %245, %245 : vector<4x32xf32>
    %cst_106 = arith.constant dense<0.000000e+00> : vector<4xf32>
    %247 = vector.multi_reduction <add>, %246, %cst_106 [1] : vector<4x32xf32> to vector<4xf32>
    %248 = vector.shape_cast %247 : vector<4xf32> to vector<4x1xf32>
    %cst_107 = arith.constant 3.200000e+01 : f32
    %249 = vector.broadcast %cst_107 : f32 to vector<4x1xf32>
    %250 = arith.divf %248, %249 : vector<4x1xf32>
    %251 = vector.broadcast %243 : vector<4x1xf32> to vector<4x32xf32>
    %252 = arith.subf %237, %251 : vector<4x32xf32>
    %cst_108 = arith.constant 9.99999974E-6 : f32
    %253 = vector.broadcast %cst_108 : f32 to vector<4x1xf32>
    %254 = arith.addf %250, %253 : vector<4x1xf32>
    %255 = math.rsqrt %254 : vector<4x1xf32>
    %256 = vector.broadcast %255 : vector<4x1xf32> to vector<4x32xf32>
    %257 = arith.mulf %252, %256 : vector<4x32xf32>
    %258 = vector.broadcast %238 : vector<1x32xf32> to vector<4x32xf32>
    %259 = arith.mulf %257, %258 : vector<4x32xf32>
    %260 = vector.broadcast %239 : vector<1x32xf32> to vector<4x32xf32>
    %261 = arith.addf %259, %260 : vector<4x32xf32>
    %c1_109 = arith.constant 1 : index
    %c0_110 = arith.constant 0 : index
    %c0_111 = arith.constant 0 : index
    %262 = vector.load %arg12[%c1_109, %c0_110, %c0_111] : memref<2x32x64xf32, #tpu.memory_space<vmem>>, vector<1x32x64xf32>
    %263 = vector.shape_cast %262 : vector<1x32x64xf32> to vector<32x64xf32>
    %cst_112 = arith.constant dense<0.000000e+00> : vector<4x64xf32>
    %264 = tpu.matmul %261, %263, %cst_112 {dimension_numbers = #tpu.dot_dimension_numbers<[1], [0], [0], [1], [0, 0, 1, 1], [], []>} : vector<4x32xf32>, vector<32x64xf32>, vector<4x64xf32> -> vector<4x64xf32>
    %c1_113 = arith.constant 1 : index
    %c0_114 = arith.constant 0 : index
    %c0_115 = arith.constant 0 : index
    %265 = vector.load %arg13[%c1_113, %c0_114, %c0_115] : memref<2x1x64xf32, #tpu.memory_space<vmem>>, vector<1x1x64xf32>
    %266 = vector.shape_cast %265 : vector<1x1x64xf32> to vector<1x64xf32>
    %267 = vector.broadcast %266 : vector<1x64xf32> to vector<4x64xf32>
    %268 = arith.addf %264, %267 : vector<4x64xf32>
    %cst_116 = arith.constant 0.000000e+00 : f32
    %269 = vector.broadcast %cst_116 : f32 to vector<4x64xf32>
    %270 = arith.maximumf %268, %269 : vector<4x64xf32>
    %c1_117 = arith.constant 1 : index
    %c0_118 = arith.constant 0 : index
    %c0_119 = arith.constant 0 : index
    %271 = vector.load %arg14[%c1_117, %c0_118, %c0_119] : memref<2x64x32xf32, #tpu.memory_space<vmem>>, vector<1x64x32xf32>
    %272 = vector.shape_cast %271 : vector<1x64x32xf32> to vector<64x32xf32>
    %cst_120 = arith.constant dense<0.000000e+00> : vector<4x32xf32>
    %273 = tpu.matmul %270, %272, %cst_120 {dimension_numbers = #tpu.dot_dimension_numbers<[1], [0], [0], [1], [0, 0, 1, 1], [], []>} : vector<4x64xf32>, vector<64x32xf32>, vector<4x32xf32> -> vector<4x32xf32>
    %c1_121 = arith.constant 1 : index
    %c0_122 = arith.constant 0 : index
    %c0_123 = arith.constant 0 : index
    %274 = vector.load %arg15[%c1_121, %c0_122, %c0_123] : memref<2x1x32xf32, #tpu.memory_space<vmem>>, vector<1x1x32xf32>
    %275 = vector.shape_cast %274 : vector<1x1x32xf32> to vector<1x32xf32>
    %276 = vector.broadcast %275 : vector<1x32xf32> to vector<4x32xf32>
    %277 = arith.addf %273, %276 : vector<4x32xf32>
    %278 = arith.addf %261, %277 : vector<4x32xf32>
    %279 = vector.extract_strided_slice %236 {offsets = [2, 0], sizes = [1, 32], strides = [1, 1]} : vector<4x32xf32> to vector<1x32xf32>
    %280 = vector.extract_strided_slice %236 {offsets = [3, 0], sizes = [1, 32], strides = [1, 1]} : vector<4x32xf32> to vector<1x32xf32>
    %cst_124 = arith.constant dense<0.000000e+00> : vector<4xf32>
    %281 = vector.multi_reduction <add>, %278, %cst_124 [1] : vector<4x32xf32> to vector<4xf32>
    %282 = vector.shape_cast %281 : vector<4xf32> to vector<4x1xf32>
    %cst_125 = arith.constant 3.200000e+01 : f32
    %283 = vector.broadcast %cst_125 : f32 to vector<4x1xf32>
    %284 = arith.divf %282, %283 : vector<4x1xf32>
    %285 = vector.broadcast %284 : vector<4x1xf32> to vector<4x32xf32>
    %286 = arith.subf %278, %285 : vector<4x32xf32>
    %287 = arith.mulf %286, %286 : vector<4x32xf32>
    %cst_126 = arith.constant dense<0.000000e+00> : vector<4xf32>
    %288 = vector.multi_reduction <add>, %287, %cst_126 [1] : vector<4x32xf32> to vector<4xf32>
    %289 = vector.shape_cast %288 : vector<4xf32> to vector<4x1xf32>
    %cst_127 = arith.constant 3.200000e+01 : f32
    %290 = vector.broadcast %cst_127 : f32 to vector<4x1xf32>
    %291 = arith.divf %289, %290 : vector<4x1xf32>
    %292 = vector.broadcast %284 : vector<4x1xf32> to vector<4x32xf32>
    %293 = arith.subf %278, %292 : vector<4x32xf32>
    %cst_128 = arith.constant 9.99999974E-6 : f32
    %294 = vector.broadcast %cst_128 : f32 to vector<4x1xf32>
    %295 = arith.addf %291, %294 : vector<4x1xf32>
    %296 = math.rsqrt %295 : vector<4x1xf32>
    %297 = vector.broadcast %296 : vector<4x1xf32> to vector<4x32xf32>
    %298 = arith.mulf %293, %297 : vector<4x32xf32>
    %299 = vector.broadcast %279 : vector<1x32xf32> to vector<4x32xf32>
    %300 = arith.mulf %298, %299 : vector<4x32xf32>
    %301 = vector.broadcast %280 : vector<1x32xf32> to vector<4x32xf32>
    %302 = arith.addf %300, %301 : vector<4x32xf32>
    %cst_129 = arith.constant dense<0.000000e+00> : vector<2x32xf32>
    %303 = tpu.matmul %94, %302, %cst_129 {dimension_numbers = #tpu.dot_dimension_numbers<[1], [0], [0], [1], [0, 0, 1, 1], [], []>} : vector<2x4xf32>, vector<4x32xf32>, vector<2x32xf32> -> vector<2x32xf32>
    %c0_130 = arith.constant 0 : index
    %c0_131 = arith.constant 0 : index
    %304 = vector.load %arg18[%c0_130, %c0_131] : memref<2x32xf32, #tpu.memory_space<vmem>>, vector<2x32xf32>
    tpu.vector_store %arg18[%c0_130, %c0_131], %303 {strides = array<i32>} : memref<2x32xf32, #tpu.memory_space<vmem>>, vector<2x32xf32>,
    return
  }
}

</mosaic_0001>

<llo_original>
// kernel: fwd.1
$region0: #{fwd.1}
  #allocation0 [shape = 'u32[]', space=smem, size = 0x4, offset = 0x4, fixed_abs, tag = 'smem constant byte address 0x4 - core index']
  #allocation1 [shape = 'u32[72,128]{1,0:T(1,128)}', space=vmem, size = 0x9000, scoped, tag = 'internal scratch']
  %s0 = inlined_call_operand.vmem [shape: f32[2,64], index: 0, kind: input, shape index: {}]
  %s1 = inlined_call_operand.vmem [shape: f32[4,32], index: 1, kind: input, shape index: {}]
  %s2 = inlined_call_operand.vmem [shape: s32[4,1], index: 2, kind: input, shape index: {}]
  %s3 = inlined_call_operand.vmem [shape: f32[3,32], index: 3, kind: input, shape index: {}]
  %s4 = inlined_call_operand.vmem [shape: f32[64,64], index: 4, kind: input, shape index: {}]
  %s5 = inlined_call_operand.vmem [shape: f32[1,64], index: 5, kind: input, shape index: {}]
  %s6 = inlined_call_operand.hbm [shape: f32[32,32], index: 6, kind: input, shape index: {}]
  %s7 = inlined_call_operand.vmem [shape: f32[1,32], index: 7, kind: input, shape index: {}]
  %s8 = inlined_call_operand.vmem [shape: f32[2,32,96], index: 8, kind: input, shape index: {}]
  %s9 = inlined_call_operand.vmem [shape: f32[2,1,96], index: 9, kind: input, shape index: {}]
  %s10 = inlined_call_operand.vmem [shape: f32[2,32,32], index: 10, kind: input, shape index: {}]
  %s11 = inlined_call_operand.vmem [shape: f32[2,1,32], index: 11, kind: input, shape index: {}]
  %s12 = inlined_call_operand.hbm [shape: f32[2,32,64], index: 12, kind: input, shape index: {}]
  %s13 = inlined_call_operand.vmem [shape: f32[2,1,64], index: 13, kind: input, shape index: {}]
  %s14 = inlined_call_operand.vmem [shape: f32[2,64,32], index: 14, kind: input, shape index: {}]
  %s15 = inlined_call_operand.vmem [shape: f32[2,1,32], index: 15, kind: input, shape index: {}]
  %s16 = inlined_call_operand.vmem [shape: f32[2,4,32], index: 16, kind: input, shape index: {}]
  %s17 = inlined_call_operand.vmem [shape: f32[2,64], index: 17, kind: output, shape index: {0}]
  %s18 = inlined_call_operand.hbm [shape: f32[2,32], index: 18, kind: output, shape index: {1}]
  %19 = xla_tuple %s17, %s18
  %s20 = sld [smem:[#allocation0]]
  $region94: #{fwd.1} parent=0
    _
  %s22 = ssub.s32 1, %s20
  %s23 = scalar_select 0, %s22, %s20
  $region1: #{fwd.1} parent=0
    #allocation2 [shape = 'u8[16384]{0}', space=vmem, size = 0x4000, scoped, tag = 'input window, operand 6, single buffered']
    #allocation3 [shape = 's32[1]{0}', space=sflag, size = 0x4, scoped, tag = 'scoped memory for fwd.1']
    #allocation4 [shape = 's32[1]{0}', space=sflag, size = 0x4, scoped, tag = 'scoped memory for fwd.1']
    #allocation5 [shape = 'u8[32768]{0}', space=vmem, size = 0x8000, scoped, tag = 'input window, operand 12, single buffered']
    #allocation6 [shape = 's32[1]{0}', space=sflag, size = 0x4, scoped, tag = 'scoped memory for fwd.1']
    #allocation7 [shape = 'u8[1024]{0}', space=vmem, size = 0x400, scoped, tag = 'output window, operand 1, single buffered']
    %24 = vsyncpa [#allocation3], 0
    %25 = vsyncpa [#allocation6], 0
    %26 = vsyncpa [#allocation4], 0
    // Predicated region
    $region2: #{fwd.1} parent=1 // pred_check
      _
    $region3: #{fwd.1} parent=1 // pred_check_branch
      %28 = sbr.rel (0) target = $region5
    $region4: #{fwd.1} parent=1 // pred_region
      _
    $region5: #{fwd.1} parent=1 // pred_fallthru
      _
    // Predicated region
    $region6: #{fwd.1} parent=1 // pred_check
      _
    $region7: #{fwd.1} parent=1 // pred_check_branch
      %30 = sbr.rel (0) target = $region9
    $region8: #{fwd.1} parent=1 // pred_region
      _
    $region9: #{fwd.1} parent=1 // pred_fallthru
      _
    // Predicated region
    $region10: #{fwd.1} parent=1 // pred_check
      _
    $region11: #{fwd.1} parent=1 // pred_check_branch
      %32 = sbr.rel (0) target = $region13
    $region12: #{fwd.1} parent=1 // pred_region
      _
    $region13: #{fwd.1} parent=1 // pred_fallthru
      _
    // Predicated region
    $region14: #{fwd.1} parent=1 // pred_check
      _
    $region15: #{fwd.1} parent=1 // pred_check_branch
      %34 = sbr.rel (0) target = $region17
    $region16: #{fwd.1} parent=1 // pred_region
      _
    $region17: #{fwd.1} parent=1 // pred_fallthru
      _
    // Predicated region
    $region18: #{fwd.1} parent=1 // pred_check
      _
    $region19: #{fwd.1} parent=1 // pred_check_branch
      %36 = sbr.rel (0) target = $region21
    $region20: #{fwd.1} parent=1 // pred_region
      _
    $region21: #{fwd.1} parent=1 // pred_fallthru
      _
    // Predicated region
    $region22: #{fwd.1} parent=1 // pred_check
      _
    $region23: #{fwd.1} parent=1 // pred_check_branch
      %38 = sbr.rel (0) target = $region25
    $region24: #{fwd.1} parent=1 // pred_region
      _
    $region25: #{fwd.1} parent=1 // pred_fallthru
      _
    // Predicated region
    $region26: #{fwd.1} parent=1 // pred_check
      _
    $region27: #{fwd.1} parent=1 // pred_check_branch
      %40 = sbr.rel (0) target = $region29
    $region28: #{fwd.1} parent=1 // pred_region
      %42 = vsyncadd [#allocation3], 0
      %s43 = sshll.u32 %s6, 4
      %s44 = int_to_ptr.hbm [resolvable:$true] %s43
      %s45 = sshll.u32 [#allocation2], 4
      %s46 = int_to_ptr.vmem [resolvable:$true] %s45
      %51 = dma.hbm_to_vmem [thread:$0]  %s44, 512, %s46, [#allocation3], 128, 128, 8
    $region29: #{fwd.1} parent=1 // pred_fallthru
      _
    // Predicated region
    $region30: #{fwd.1} parent=1 // pred_check
      _
    $region31: #{fwd.1} parent=1 // pred_check_branch
      %53 = sbr.rel (0) target = $region33
    $region32: #{fwd.1} parent=1 // pred_region
      _
    $region33: #{fwd.1} parent=1 // pred_fallthru
      _
    // Predicated region
    $region34: #{fwd.1} parent=1 // pred_check
      _
    $region35: #{fwd.1} parent=1 // pred_check_branch
      %55 = sbr.rel (0) target = $region37
    $region36: #{fwd.1} parent=1 // pred_region
      _
    $region37: #{fwd.1} parent=1 // pred_fallthru
      _
    // Predicated region
    $region38: #{fwd.1} parent=1 // pred_check
      _
    $region39: #{fwd.1} parent=1 // pred_check_branch
      %57 = sbr.rel (0) target = $region41
    $region40: #{fwd.1} parent=1 // pred_region
      _
    $region41: #{fwd.1} parent=1 // pred_fallthru
      _
    // Predicated region
    $region42: #{fwd.1} parent=1 // pred_check
      _
    $region43: #{fwd.1} parent=1 // pred_check_branch
      %59 = sbr.rel (0) target = $region45
    $region44: #{fwd.1} parent=1 // pred_region
      _
    $region45: #{fwd.1} parent=1 // pred_fallthru
      _
    // Predicated region
    $region46: #{fwd.1} parent=1 // pred_check
      _
    $region47: #{fwd.1} parent=1 // pred_check_branch
      %61 = sbr.rel (0) target = $region49
    $region48: #{fwd.1} parent=1 // pred_region
      _
    $region49: #{fwd.1} parent=1 // pred_fallthru
      _
    // Predicated region
    $region50: #{fwd.1} parent=1 // pred_check
      _
    $region51: #{fwd.1} parent=1 // pred_check_branch
      %63 = sbr.rel (0) target = $region53
    $region52: #{fwd.1} parent=1 // pred_region
      %65 = vsyncadd [#allocation6], 0
      %s66 = sshll.u32 %s12, 4
      %s67 = int_to_ptr.hbm [resolvable:$true] %s66
      %s68 = sshll.u32 [#allocation5], 4
      %s69 = int_to_ptr.vmem [resolvable:$true] %s68
      %74 = dma.hbm_to_vmem [thread:$0]  %s67, 1024, %s69, [#allocation6], 128, 128, 8
    $region53: #{fwd.1} parent=1 // pred_fallthru
      _
    // Predicated region
    $region54: #{fwd.1} parent=1 // pred_check
      _
    $region55: #{fwd.1} parent=1 // pred_check_branch
      %76 = sbr.rel (0) target = $region57
    $region56: #{fwd.1} parent=1 // pred_region
      _
    $region57: #{fwd.1} parent=1 // pred_fallthru
      _
    // Predicated region
    $region58: #{fwd.1} parent=1 // pred_check
      _
    $region59: #{fwd.1} parent=1 // pred_check_branch
      %78 = sbr.rel (0) target = $region61
    $region60: #{fwd.1} parent=1 // pred_region
      _
    $region61: #{fwd.1} parent=1 // pred_fallthru
      _
    // Predicated region
    $region62: #{fwd.1} parent=1 // pred_check
      _
    $region63: #{fwd.1} parent=1 // pred_check_branch
      %80 = sbr.rel (0) target = $region65
    $region64: #{fwd.1} parent=1 // pred_region
      _
    $region65: #{fwd.1} parent=1 // pred_fallthru
      _
    // Predicated region
    $region66: #{fwd.1} parent=1 // pred_check
      _
    $region67: #{fwd.1} parent=1 // pred_check_branch
      %82 = sbr.rel (0) target = $region69
    $region68: #{fwd.1} parent=1 // pred_region
      _
    $region69: #{fwd.1} parent=1 // pred_fallthru
      _
    // Predicated region
    $region70: #{fwd.1} parent=1 // pred_check
      _
    $region71: #{fwd.1} parent=1 // pred_check_branch
      %84 = sbr.rel (0) target = $region73
    $region72: #{fwd.1} parent=1 // pred_region
      %86 = dma.done [#allocation3], 512
    $region73: #{fwd.1} parent=1 // pred_fallthru
      _
    // Predicated region
    $region74: #{fwd.1} parent=1 // pred_check
      _
    $region75: #{fwd.1} parent=1 // pred_check_branch
      %88 = sbr.rel (0) target = $region77
    $region76: #{fwd.1} parent=1 // pred_region
      %90 = dma.done [#allocation6], 1024
    $region77: #{fwd.1} parent=1 // pred_fallthru
      _
    %v91 = vld [vmem:[%s0] sm:$0x3]
    %v92 = vld [vmem:[%s4] sm:$0xff]
    %v93 = vld [vmem:[%s4 + $0x8] sm:$0xff]
    %v94 = vld [vmem:[%s4 + $0x10] sm:$0xff]
    %v95 = vld [vmem:[%s4 + $0x18] sm:$0xff]
    %v96 = vld [vmem:[%s4 + $0x20] sm:$0xff]
    %v97 = vld [vmem:[%s4 + $0x28] sm:$0xff]
    %v98 = vld [vmem:[%s4 + $0x30] sm:$0xff]
    %v99 = vld [vmem:[%s4 + $0x38] sm:$0xff]
    %v100 = vld [vmem:[%s5] sm:$0x1]
    %v102 = vperm.slane %v100, 0
    %vm104 = vcmask 523264
    %v106 = vsel %vm104, %v91, 0
    %108 = vmatpush.msra.mxu0 0.0
    %109 = vmatpush.msra.mxu0 0.0
    %110 = vmatpush.msra.mxu0 0.0
    %111 = vmatpush.msra.mxu0 0.0
    %112 = vmatpush.msra.mxu0 0.0
    %113 = vmatpush.msra.mxu0 0.0
    %114 = vmatpush.msra.mxu0 0.0
    %115 = vmatpush.msra.mxu0 0.0
    %116 = vmatpush.msra.mxu0 %v99
    %117 = vmatpush.msra.mxu0 %v98
    %118 = vmatpush.msra.mxu0 %v97
    %119 = vmatpush.msra.mxu0 %v96
    %120 = vmatpush.msra.mxu0 %v95
    %121 = vmatpush.msra.mxu0 %v94
    %122 = vmatpush.msra.mxu0 %v93
    %123 = vmatpush.msra.mxu0 %v92
    %124 = vmatmul.f32.gmra.mxu0 %v106
    %v125 = vpop.f32.mrf.mxu0
    %v126 = vadd.f32 %v102, %v125
    %127 = vdwg.mxu0
    %vm128 = vcmask 517120
    %129 = vst.msk [vmem:[%s17] sm:$0x3] %vm128, %v126
    %v130 = vld [vmem:[%s1] sm:$0xf]
    %v131 = vld [vmem:[#allocation2] sm:$0xff]
    %v132 = vld [vmem:[#allocation2 + $0x8] sm:$0xff]
    %v133 = vld [vmem:[#allocation2 + $0x10] sm:$0xff]
    %v134 = vld [vmem:[#allocation2 + $0x18] sm:$0xff]
    %v135 = vld [vmem:[%s7] sm:$0x1]
    %v137 = vperm.slane %v135, 0
    %vm139 = vcmask 261120
    %v141 = vsel %vm139, %v130, 0
    %143 = vmatpush.msra.mxu0 0.0
    %144 = vmatpush.msra.mxu0 0.0
    %145 = vmatpush.msra.mxu0 0.0
    %146 = vmatpush.msra.mxu0 0.0
    %147 = vmatpush.msra.mxu0 0.0
    %148 = vmatpush.msra.mxu0 0.0
    %149 = vmatpush.msra.mxu0 0.0
    %150 = vmatpush.msra.mxu0 0.0
    %151 = vmatpush.msra.mxu0 0.0
    %152 = vmatpush.msra.mxu0 0.0
    %153 = vmatpush.msra.mxu0 0.0
    %154 = vmatpush.msra.mxu0 0.0
    %155 = vmatpush.msra.mxu0 %v134
    %156 = vmatpush.msra.mxu0 %v133
    %157 = vmatpush.msra.mxu0 %v132
    %158 = vmatpush.msra.mxu0 %v131
    %159 = vmatmul.f32.gmra.mxu0 %v141
    %v160 = vpop.f32.mrf.mxu0
    %v161 = vadd.f32 %v137, %v160
    %162 = vdwg.mxu0
    %v163 = vlaneseq
    %v164 = vand.u32 %v163, 127
    %v165 = vld [vmem:[%s2] sm:$0xf]
    %166 = vset.pattern.permute.xlu0 0
    %167 = vperm.xlu0 %166, %v165
    %v168 = vpop.permute.xlu0 %167
    %vm169 = vcmp.eq.s32.totalorder %v164, %v168
    %v170 = vsel %vm169, 1, 0
    %v171 = vcvt.s32.f32 %v170
    %v172 = vld [vmem:[%s3] sm:$0x7]
    %vm173 = vcmask 23552
    %v175 = vsel %vm173, %v171, 0
    %vm177 = vcmask 1042432
    %v179 = vsel %vm177, %v172, 0
    %181 = vmatpush.msra.mxu0 0.0
    %182 = vmatpush.msra.mxu0 0.0
    %183 = vmatpush.msra.mxu0 0.0
    %184 = vmatpush.msra.mxu0 0.0
    %185 = vmatpush.msra.mxu0 0.0
    %186 = vmatpush.msra.mxu0 0.0
    %187 = vmatpush.msra.mxu0 0.0
    %188 = vmatpush.msra.mxu0 0.0
    %189 = vmatpush.msra.mxu0 0.0
    %190 = vmatpush.msra.mxu0 0.0
    %191 = vmatpush.msra.mxu0 0.0
    %192 = vmatpush.msra.mxu0 0.0
    %193 = vmatpush.msra.mxu0 0.0
    %194 = vmatpush.msra.mxu0 0.0
    %195 = vmatpush.msra.mxu0 0.0
    %196 = vmatpush.msra.mxu0 %v179
    %197 = vmatmul.f32.gmra.mxu0 %v175
    %v198 = vpop.f32.mrf.mxu0
    %v199 = vadd.f32 0.0, %v198
    %200 = vdwg.mxu0
    %v201 = vadd.f32 %v161, %v199
    %v202 = vlaneseq
    %v203 = vshrl.u32 %v202, 7
    %v204 = vadd.s32 %v203, 8
    %v205 = vcvt.s32.f32 %v203
    %v206 = vcvt.s32.f32 %v204
    %v207 = vmul.f32 %v205, 0.25
    %v208 = vmul.f32 %v206, 0.25
    %v209 = vfloor.f32 %v207
    %v210 = vfloor.f32 %v208
    %v211 = vmul.f32 %v209, 4.0
    %v212 = vmul.f32 %v210, 4.0
    %v213 = vsub.f32 %v205, %v211
    %v214 = vsub.f32 %v206, %v212
    %v215 = vcvt.s32.f32 %v164
    %vm216 = vcmp.eq.f32.partialorder %v213, %v215
    %vm217 = vcmp.eq.f32.partialorder %v214, %v215
    %v218 = vsel %vm216, 1, 0
    %v219 = vsel %vm217, 1, 0
    %v220 = vcvt.s32.f32 %v218
    %v221 = vcvt.s32.f32 %v219
    %v222 = vmul.f32 %v215, 0.125
    %v223 = vfloor.f32 %v222
    %vm224 = vcmp.eq.f32.partialorder %v223, %v209
    %vm225 = vcmp.eq.f32.partialorder %v223, %v210
    %v226 = vsel %vm224, 1, 0
    %v227 = vsel %vm225, 1, 0
    %v228 = vcvt.s32.f32 %v226
    %v229 = vcvt.s32.f32 %v227
    %v230 = vmul.f32 %v215, 0.25
    %v231 = vfloor.f32 %v230
    %vm232 = vcmp.eq.f32.partialorder %v209, %v231
    %vm233 = vcmp.eq.f32.partialorder %v210, %v231
    %v234 = vsel %vm232, 1, 0
    %v235 = vsel %vm233, 1, 0
    %v236 = vcvt.s32.f32 %v234
    %v237 = vcvt.s32.f32 %v235
    %v238 = vmul.f32 %v205, 0.5
    %v239 = vfloor.f32 %v238
    %v240 = vmul.f32 %v231, 4.0
    %v241 = vsub.f32 %v215, %v240
    %v242 = vmul.f32 %v241, 0.5
    %v243 = vfloor.f32 %v242
    %vm244 = vcmp.eq.f32.partialorder %v239, %v243
    %v245 = vsel %vm244, 0.0, -1e+30
    %v246 = vmul.f32 %v215, 0.5
    %v247 = vfloor.f32 %v246
    %vm248 = vcmp.eq.f32.partialorder %v247, %v205
    %v249 = vsel %vm248, 1, 0
    %v250 = vcvt.s32.f32 %v249
    %v251 = vmul.f32 %v250, 0.5
    %v252 = vld [vmem:[%s8] sm:$0xff]
    %v253 = vld [vmem:[%s8 + $0x8] sm:$0xff]
    %v254 = vld [vmem:[%s8 + $0x10] sm:$0xff]
    %v255 = vld [vmem:[%s8 + $0x18] sm:$0xff]
    %v256 = vld [vmem:[%s9] sm:$0x1]
    %v258 = vperm.slane %v256, 0
    %v261 = vsel %vm139, %v201, 0
    %263 = vmatpush.msra.mxu0 0.0
    %264 = vmatpush.msra.mxu0 0.0
    %265 = vmatpush.msra.mxu0 0.0
    %266 = vmatpush.msra.mxu0 0.0
    %267 = vmatpush.msra.mxu0 0.0
    %268 = vmatpush.msra.mxu0 0.0
    %269 = vmatpush.msra.mxu0 0.0
    %270 = vmatpush.msra.mxu0 0.0
    %271 = vmatpush.msra.mxu0 0.0
    %272 = vmatpush.msra.mxu0 0.0
    %273 = vmatpush.msra.mxu0 0.0
    %274 = vmatpush.msra.mxu0 0.0
    %275 = vmatpush.msra.mxu0 %v255
    %276 = vmatpush.msra.mxu0 %v254
    %277 = vmatpush.msra.mxu0 %v253
    %278 = vmatpush.msra.mxu0 %v252
    %279 = vmatmul.f32.gmra.mxu0 %v261
    %v280 = vpop.f32.mrf.mxu0
    %v281 = vadd.f32 %v258, %v280
    %282 = vdwg.mxu0
    %284 = vrot.lane.b32.xlu0 %v281, 96
    %v285 = vpop.permute.xlu0 %284
    %vm286 = vcmask 31744
    %v288 = vsel %vm286, %v220, 0
    %v291 = vsel %vm286, %v221, 0
    %vm293 = vcmask 1043456
    %v294 = vsel %vm293, %v285, 0
    %296 = vmatpush.msra.mxu0 0.0
    %297 = vmatpush.msra.mxu0 0.0
    %298 = vmatpush.msra.mxu0 0.0
    %299 = vmatpush.msra.mxu0 0.0
    %300 = vmatpush.msra.mxu0 0.0
    %301 = vmatpush.msra.mxu0 0.0
    %302 = vmatpush.msra.mxu0 0.0
    %303 = vmatpush.msra.mxu0 0.0
    %304 = vmatpush.msra.mxu0 0.0
    %305 = vmatpush.msra.mxu0 0.0
    %306 = vmatpush.msra.mxu0 0.0
    %307 = vmatpush.msra.mxu0 0.0
    %308 = vmatpush.msra.mxu0 0.0
    %309 = vmatpush.msra.mxu0 0.0
    %310 = vmatpush.msra.mxu0 0.0
    %311 = vmatpush.msra.mxu0 %v294
    %312 = vmatmul.f32.gmra.mxu0 %v288
    %v313 = vpop.f32.mrf.mxu0
    %v314 = vadd.f32 0.0, %v313
    %315 = vmatmul.f32.gmra.mxu0 %v291
    %v316 = vpop.f32.mrf.mxu0
    %v317 = vadd.f32 0.0, %v316
    %318 = vdwg.mxu0
    %v319 = vmul.f32 %v314, %v228
    %v320 = vmul.f32 %v317, %v229
    %323 = vrot.lane.b32.xlu0 %v228, 32
    %v324 = vpop.permute.xlu0 %323
    %325 = vrot.lane.b32.xlu0 %v229, 32
    %v326 = vpop.permute.xlu0 %325
    %v329 = vmul.f32 %v314, %v324
    %v330 = vmul.f32 %v317, %v326
    %v331 = vsel %vm139, %v281, 0
    %v334 = vsel %vm139, %v319, 0
    %v337 = vsel %vm139, %v320, 0
    %339 = vmatpush.xpose.msra.mxu0 0.0
    %340 = vmatpush.xpose.msra.mxu0 0.0
    %341 = vmatpush.xpose.msra.mxu0 0.0
    %342 = vmatpush.xpose.msra.mxu0 0.0
    %343 = vmatpush.xpose.msra.mxu0 0.0
    %344 = vmatpush.xpose.msra.mxu0 0.0
    %345 = vmatpush.xpose.msra.mxu0 0.0
    %346 = vmatpush.xpose.msra.mxu0 0.0
    %347 = vmatpush.xpose.msra.mxu0 0.0
    %348 = vmatpush.xpose.msra.mxu0 0.0
    %349 = vmatpush.xpose.msra.mxu0 0.0
    %350 = vmatpush.xpose.msra.mxu0 0.0
    %351 = vmatpush.xpose.msra.mxu0 0.0
    %352 = vmatpush.xpose.msra.mxu0 0.0
    %353 = vmatpush.xpose.msra.mxu0 %v337
    %354 = vmatpush.xpose.msra.mxu0 %v334
    %355 = vmatmul.f32.gmra.mxu0 %v331
    %v356 = vpop.f32.mrf.mxu0
    %v357 = vadd.f32 0.0, %v356
    %358 = vdwg.mxu0
    %v359 = vmul.f32 %v357, 0.35355338
    %v360 = vadd.f32 %v359, %v245
    %vm361 = vcmask 125952
    %v362 = vsel %vm361, %v360, -inf
    %363 = vmax.xlane.f32.xlu0 %v362
    %v364 = vpop.xlane.xlu0 %363
    %v365 = vsub.f32 %v360, %v364
    %v366 = vmul.f32 %v365, 1.442695
    %v367 = vpow.pop %v366
    %vm368 = vcmask 130048
    %v370 = vsel %vm368, %v367, 0
    %372 = vmatpush.msra.mxu0 0.0
    %373 = vmatpush.msra.mxu0 0.0
    %374 = vmatpush.msra.mxu0 0.0
    %375 = vmatpush.msra.mxu0 0.0
    %376 = vmatpush.msra.mxu0 0.0
    %377 = vmatpush.msra.mxu0 0.0
    %378 = vmatpush.msra.mxu0 0.0
    %379 = vmatpush.msra.mxu0 0.0
    %380 = vmatpush.msra.mxu0 0.0
    %381 = vmatpush.msra.mxu0 0.0
    %382 = vmatpush.msra.mxu0 0.0
    %383 = vmatpush.msra.mxu0 0.0
    %384 = vmatpush.msra.mxu0 0.0
    %385 = vmatpush.msra.mxu0 0.0
    %386 = vmatpush.msra.mxu0 %v237
    %387 = vmatpush.msra.mxu0 %v236
    %388 = vmatmul.f32.gmra.mxu0 %v370
    %v389 = vpop.f32.mrf.mxu0
    %v390 = vadd.f32 0.0, %v389
    %391 = vdwg.mxu0
    %v392 = vmax.f32 %v390, 1e-30
    %v393 = vrcp.pop %v392
    %v394 = vmul.f32 %v367, %v393
    %397 = vrot.lane.b32.xlu0 %v329, 96
    %v398 = vpop.permute.xlu0 %397
    %399 = vrot.lane.b32.xlu0 %v330, 96
    %v400 = vpop.permute.xlu0 %399
    %v404 = vsel %vm368, %v394, 0
    %406 = vmatpush.msra.mxu0 0.0
    %407 = vmatpush.msra.mxu0 0.0
    %408 = vmatpush.msra.mxu0 0.0
    %409 = vmatpush.msra.mxu0 0.0
    %410 = vmatpush.msra.mxu0 0.0
    %411 = vmatpush.msra.mxu0 0.0
    %412 = vmatpush.msra.mxu0 0.0
    %413 = vmatpush.msra.mxu0 0.0
    %414 = vmatpush.msra.mxu0 0.0
    %415 = vmatpush.msra.mxu0 0.0
    %416 = vmatpush.msra.mxu0 0.0
    %417 = vmatpush.msra.mxu0 0.0
    %418 = vmatpush.msra.mxu0 0.0
    %419 = vmatpush.msra.mxu0 0.0
    %420 = vmatpush.msra.mxu0 %v400
    %421 = vmatpush.msra.mxu0 %v398
    %422 = vmatmul.f32.gmra.mxu0 %v404
    %v423 = vpop.f32.mrf.mxu0
    %v424 = vadd.f32 0.0, %v423
    %425 = vdwg.mxu0
    %v426 = vld [vmem:[%s10] sm:$0xff]
    %v427 = vld [vmem:[%s10 + $0x8] sm:$0xff]
    %v428 = vld [vmem:[%s10 + $0x10] sm:$0xff]
    %v429 = vld [vmem:[%s10 + $0x18] sm:$0xff]
    %v430 = vld [vmem:[%s11] sm:$0x1]
    %v432 = vperm.slane %v430, 0
    %v435 = vsel %vm139, %v424, 0
    %437 = vmatpush.msra.mxu0 0.0
    %438 = vmatpush.msra.mxu0 0.0
    %439 = vmatpush.msra.mxu0 0.0
    %440 = vmatpush.msra.mxu0 0.0
    %441 = vmatpush.msra.mxu0 0.0
    %442 = vmatpush.msra.mxu0 0.0
    %443 = vmatpush.msra.mxu0 0.0
    %444 = vmatpush.msra.mxu0 0.0
    %445 = vmatpush.msra.mxu0 0.0
    %446 = vmatpush.msra.mxu0 0.0
    %447 = vmatpush.msra.mxu0 0.0
    %448 = vmatpush.msra.mxu0 0.0
    %449 = vmatpush.msra.mxu0 %v429
    %450 = vmatpush.msra.mxu0 %v428
    %451 = vmatpush.msra.mxu0 %v427
    %452 = vmatpush.msra.mxu0 %v426
    %453 = vmatmul.f32.gmra.mxu0 %v435
    %v454 = vpop.f32.mrf.mxu0
    %v455 = vadd.f32 %v432, %v454
    %456 = vdwg.mxu0
    %v457 = vld [vmem:[%s16] sm:$0xf]
    %v458 = vadd.f32 %v201, %v455
    %vm459 = vcmask 257024
    %v460 = vsel %vm459, %v458, 0.0
    %461 = vadd.xlane.f32.xlu0 %v460
    %v462 = vpop.xlane.xlu0 %461
    %v463 = vrcp.pop 32.0
    %v464 = vmul.f32 32.0, %v463
    %v465 = vsub.f32 1.0, %v464
    %v466 = vmul.f32 %v463, %v465
    %v467 = vadd.f32 %v463, %v466
    %vm468 = vweird.f32 %v463
    %v469 = vsel %vm468, %v463, %v467
    %v470 = vmul.f32 %v462, %v469
    %v471 = vsub.f32 %v458, %v470
    %v472 = vmul.f32 %v471, %v471
    %v473 = vsel %vm459, %v472, 0.0
    %474 = vadd.xlane.f32.xlu0 %v473
    %v475 = vpop.xlane.xlu0 %474
    %v476 = vmul.f32 %v475, %v469
    %v477 = vadd.f32 %v476, 1e-05
    %v478 = vrsqrt.pop %v477
    %v479 = vmul.f32 %v478, %v477
    %v480 = vmul.f32 %v479, %v478
    %v481 = vmul.f32 0.5, %v480
    %v482 = vsub.f32 1.5, %v481
    %v483 = vmul.f32 %v478, %v482
    %vm484 = vweird.f32 %v477
    %vm485 = vweird.f32 %v478
    %vm486 = vmor %vm484, %vm485
    %v487 = vsel %vm486, %v478, %v483
    %v488 = vmul.f32 %v471, %v487
    %v489 = vperm.slane %v457, 0
    %v490 = vmul.f32 %v488, %v489
    %v491 = vperm.slane %v457, 1
    %v492 = vadd.f32 %v490, %v491
    %v493 = vld [vmem:[#allocation5] sm:$0xff]
    %v494 = vld [vmem:[#allocation5 + $0x8] sm:$0xff]
    %v495 = vld [vmem:[#allocation5 + $0x10] sm:$0xff]
    %v496 = vld [vmem:[#allocation5 + $0x18] sm:$0xff]
    %v497 = vld [vmem:[%s13] sm:$0x1]
    %v499 = vperm.slane %v497, 0
    %v502 = vsel %vm139, %v492, 0
    %504 = vmatpush.msra.mxu0 0.0
    %505 = vmatpush.msra.mxu0 0.0
    %506 = vmatpush.msra.mxu0 0.0
    %507 = vmatpush.msra.mxu0 0.0
    %508 = vmatpush.msra.mxu0 0.0
    %509 = vmatpush.msra.mxu0 0.0
    %510 = vmatpush.msra.mxu0 0.0
    %511 = vmatpush.msra.mxu0 0.0
    %512 = vmatpush.msra.mxu0 0.0
    %513 = vmatpush.msra.mxu0 0.0
    %514 = vmatpush.msra.mxu0 0.0
    %515 = vmatpush.msra.mxu0 0.0
    %516 = vmatpush.msra.mxu0 %v496
    %517 = vmatpush.msra.mxu0 %v495
    %518 = vmatpush.msra.mxu0 %v494
    %519 = vmatpush.msra.mxu0 %v493
    %520 = vmatmul.f32.gmra.mxu0 %v502
    %v521 = vpop.f32.mrf.mxu0
    %v522 = vadd.f32 %v499, %v521
    %523 = vdwg.mxu0
    %v524 = vmax.f32 %v522, 0.0
    %v525 = vld [vmem:[%s14] sm:$0xff]
    %v526 = vld [vmem:[%s14 + $0x8] sm:$0xff]
    %v527 = vld [vmem:[%s14 + $0x10] sm:$0xff]
    %v528 = vld [vmem:[%s14 + $0x18] sm:$0xff]
    %v529 = vld [vmem:[%s14 + $0x20] sm:$0xff]
    %v530 = vld [vmem:[%s14 + $0x28] sm:$0xff]
    %v531 = vld [vmem:[%s14 + $0x30] sm:$0xff]
    %v532 = vld [vmem:[%s14 + $0x38] sm:$0xff]
    %v533 = vld [vmem:[%s15] sm:$0x1]
    %v535 = vperm.slane %v533, 0
    %v538 = vsel %vm104, %v524, 0
    %540 = vmatpush.msra.mxu0 0.0
    %541 = vmatpush.msra.mxu0 0.0
    %542 = vmatpush.msra.mxu0 0.0
    %543 = vmatpush.msra.mxu0 0.0
    %544 = vmatpush.msra.mxu0 0.0
    %545 = vmatpush.msra.mxu0 0.0
    %546 = vmatpush.msra.mxu0 0.0
    %547 = vmatpush.msra.mxu0 0.0
    %548 = vmatpush.msra.mxu0 %v532
    %549 = vmatpush.msra.mxu0 %v531
    %550 = vmatpush.msra.mxu0 %v530
    %551 = vmatpush.msra.mxu0 %v529
    %552 = vmatpush.msra.mxu0 %v528
    %553 = vmatpush.msra.mxu0 %v527
    %554 = vmatpush.msra.mxu0 %v526
    %555 = vmatpush.msra.mxu0 %v525
    %556 = vmatmul.f32.gmra.mxu0 %v538
    %v557 = vpop.f32.mrf.mxu0
    %v558 = vadd.f32 %v535, %v557
    %559 = vdwg.mxu0
    %v560 = vadd.f32 %v492, %v558
    %v561 = vsel %vm459, %v560, 0.0
    %562 = vadd.xlane.f32.xlu0 %v561
    %v563 = vpop.xlane.xlu0 %562
    %v564 = vmul.f32 %v563, %v469
    %v565 = vsub.f32 %v560, %v564
    %v566 = vmul.f32 %v565, %v565
    %v567 = vsel %vm459, %v566, 0.0
    %568 = vadd.xlane.f32.xlu0 %v567
    %v569 = vpop.xlane.xlu0 %568
    %v570 = vmul.f32 %v569, %v469
    %v571 = vadd.f32 %v570, 1e-05
    %v572 = vrsqrt.pop %v571
    %v573 = vmul.f32 %v572, %v571
    %v574 = vmul.f32 %v573, %v572
    %v575 = vmul.f32 0.5, %v574
    %v576 = vsub.f32 1.5, %v575
    %v577 = vmul.f32 %v572, %v576
    %vm578 = vweird.f32 %v571
    %vm579 = vweird.f32 %v572
    %vm580 = vmor %vm578, %vm579
    %v581 = vsel %vm580, %v572, %v577
    %v582 = vmul.f32 %v565, %v581
    %v583 = vperm.slane %v457, 2
    %v584 = vmul.f32 %v582, %v583
    %v585 = vperm.slane %v457, 3
    %v586 = vadd.f32 %v584, %v585
    %s587 = scalar_lea.vmem %s8, 32
    %v588 = vld [vmem:[%s587] sm:$0xff]
    %v589 = vld [vmem:[%s587 + $0x8] sm:$0xff]
    %v590 = vld [vmem:[%s587 + $0x10] sm:$0xff]
    %v591 = vld [vmem:[%s587 + $0x18] sm:$0xff]
    %s592 = scalar_lea.vmem %s9, 1
    %v593 = vld [vmem:[%s592] sm:$0x1]
    %v595 = vperm.slane %v593, 0
    %v598 = vsel %vm139, %v586, 0
    %600 = vmatpush.msra.mxu0 0.0
    %601 = vmatpush.msra.mxu0 0.0
    %602 = vmatpush.msra.mxu0 0.0
    %603 = vmatpush.msra.mxu0 0.0
    %604 = vmatpush.msra.mxu0 0.0
    %605 = vmatpush.msra.mxu0 0.0
    %606 = vmatpush.msra.mxu0 0.0
    %607 = vmatpush.msra.mxu0 0.0
    %608 = vmatpush.msra.mxu0 0.0
    %609 = vmatpush.msra.mxu0 0.0
    %610 = vmatpush.msra.mxu0 0.0
    %611 = vmatpush.msra.mxu0 0.0
    %612 = vmatpush.msra.mxu0 %v591
    %613 = vmatpush.msra.mxu0 %v590
    %614 = vmatpush.msra.mxu0 %v589
    %615 = vmatpush.msra.mxu0 %v588
    %616 = vmatmul.f32.gmra.mxu0 %v598
    %v617 = vpop.f32.mrf.mxu0
    %v618 = vadd.f32 %v595, %v617
    %619 = vdwg.mxu0
    %621 = vrot.lane.b32.xlu0 %v618, 96
    %v622 = vpop.permute.xlu0 %621
    %v623 = vsel %vm293, %v622, 0
    %625 = vmatpush.msra.mxu0 0.0
    %626 = vmatpush.msra.mxu0 0.0
    %627 = vmatpush.msra.mxu0 0.0
    %628 = vmatpush.msra.mxu0 0.0
    %629 = vmatpush.msra.mxu0 0.0
    %630 = vmatpush.msra.mxu0 0.0
    %631 = vmatpush.msra.mxu0 0.0
    %632 = vmatpush.msra.mxu0 0.0
    %633 = vmatpush.msra.mxu0 0.0
    %634 = vmatpush.msra.mxu0 0.0
    %635 = vmatpush.msra.mxu0 0.0
    %636 = vmatpush.msra.mxu0 0.0
    %637 = vmatpush.msra.mxu0 0.0
    %638 = vmatpush.msra.mxu0 0.0
    %639 = vmatpush.msra.mxu0 0.0
    %640 = vmatpush.msra.mxu0 %v623
    %641 = vmatmul.f32.gmra.mxu0 %v288
    %v642 = vpop.f32.mrf.mxu0
    %v643 = vadd.f32 0.0, %v642
    %644 = vmatmul.f32.gmra.mxu0 %v291
    %v645 = vpop.f32.mrf.mxu0
    %v646 = vadd.f32 0.0, %v645
    %647 = vdwg.mxu0
    %v648 = vmul.f32 %v643, %v228
    %v649 = vmul.f32 %v646, %v229
    %v650 = vmul.f32 %v643, %v324
    %v651 = vmul.f32 %v646, %v326
    %v652 = vsel %vm139, %v618, 0
    %v655 = vsel %vm139, %v648, 0
    %v658 = vsel %vm139, %v649, 0
    %660 = vmatpush.xpose.msra.mxu0 0.0
    %661 = vmatpush.xpose.msra.mxu0 0.0
    %662 = vmatpush.xpose.msra.mxu0 0.0
    %663 = vmatpush.xpose.msra.mxu0 0.0
    %664 = vmatpush.xpose.msra.mxu0 0.0
    %665 = vmatpush.xpose.msra.mxu0 0.0
    %666 = vmatpush.xpose.msra.mxu0 0.0
    %667 = vmatpush.xpose.msra.mxu0 0.0
    %668 = vmatpush.xpose.msra.mxu0 0.0
    %669 = vmatpush.xpose.msra.mxu0 0.0
    %670 = vmatpush.xpose.msra.mxu0 0.0
    %671 = vmatpush.xpose.msra.mxu0 0.0
    %672 = vmatpush.xpose.msra.mxu0 0.0
    %673 = vmatpush.xpose.msra.mxu0 0.0
    %674 = vmatpush.xpose.msra.mxu0 %v658
    %675 = vmatpush.xpose.msra.mxu0 %v655
    %676 = vmatmul.f32.gmra.mxu0 %v652
    %v677 = vpop.f32.mrf.mxu0
    %v678 = vadd.f32 0.0, %v677
    %679 = vdwg.mxu0
    %v680 = vmul.f32 %v678, 0.35355338
    %v681 = vadd.f32 %v680, %v245
    %v682 = vsel %vm361, %v681, -inf
    %683 = vmax.xlane.f32.xlu0 %v682
    %v684 = vpop.xlane.xlu0 %683
    %v685 = vsub.f32 %v681, %v684
    %v686 = vmul.f32 %v685, 1.442695
    %v687 = vpow.pop %v686
    %v689 = vsel %vm368, %v687, 0
    %691 = vmatpush.msra.mxu0 0.0
    %692 = vmatpush.msra.mxu0 0.0
    %693 = vmatpush.msra.mxu0 0.0
    %694 = vmatpush.msra.mxu0 0.0
    %695 = vmatpush.msra.mxu0 0.0
    %696 = vmatpush.msra.mxu0 0.0
    %697 = vmatpush.msra.mxu0 0.0
    %698 = vmatpush.msra.mxu0 0.0
    %699 = vmatpush.msra.mxu0 0.0
    %700 = vmatpush.msra.mxu0 0.0
    %701 = vmatpush.msra.mxu0 0.0
    %702 = vmatpush.msra.mxu0 0.0
    %703 = vmatpush.msra.mxu0 0.0
    %704 = vmatpush.msra.mxu0 0.0
    %705 = vmatpush.msra.mxu0 %v237
    %706 = vmatpush.msra.mxu0 %v236
    %707 = vmatmul.f32.gmra.mxu0 %v689
    %v708 = vpop.f32.mrf.mxu0
    %v709 = vadd.f32 0.0, %v708
    %710 = vdwg.mxu0
    %v711 = vmax.f32 %v709, 1e-30
    %v712 = vrcp.pop %v711
    %v713 = vmul.f32 %v687, %v712
    %716 = vrot.lane.b32.xlu0 %v650, 96
    %v717 = vpop.permute.xlu0 %716
    %718 = vrot.lane.b32.xlu0 %v651, 96
    %v719 = vpop.permute.xlu0 %718
    %v723 = vsel %vm368, %v713, 0
    %725 = vmatpush.msra.mxu0 0.0
    %726 = vmatpush.msra.mxu0 0.0
    %727 = vmatpush.msra.mxu0 0.0
    %728 = vmatpush.msra.mxu0 0.0
    %729 = vmatpush.msra.mxu0 0.0
    %730 = vmatpush.msra.mxu0 0.0
    %731 = vmatpush.msra.mxu0 0.0
    %732 = vmatpush.msra.mxu0 0.0
    %733 = vmatpush.msra.mxu0 0.0
    %734 = vmatpush.msra.mxu0 0.0
    %735 = vmatpush.msra.mxu0 0.0
    %736 = vmatpush.msra.mxu0 0.0
    %737 = vmatpush.msra.mxu0 0.0
    %738 = vmatpush.msra.mxu0 0.0
    %739 = vmatpush.msra.mxu0 %v719
    %740 = vmatpush.msra.mxu0 %v717
    %741 = vmatmul.f32.gmra.mxu0 %v723
    %v742 = vpop.f32.mrf.mxu0
    %v743 = vadd.f32 0.0, %v742
    %744 = vdwg.mxu0
    %s745 = scalar_lea.vmem %s10, 32
    %v746 = vld [vmem:[%s745] sm:$0xff]
    %v747 = vld [vmem:[%s745 + $0x8] sm:$0xff]
    %v748 = vld [vmem:[%s745 + $0x10] sm:$0xff]
    %v749 = vld [vmem:[%s745 + $0x18] sm:$0xff]
    %s750 = scalar_lea.vmem %s11, 1
    %v751 = vld [vmem:[%s750] sm:$0x1]
    %v753 = vperm.slane %v751, 0
    %v756 = vsel %vm139, %v743, 0
    %758 = vmatpush.msra.mxu0 0.0
    %759 = vmatpush.msra.mxu0 0.0
    %760 = vmatpush.msra.mxu0 0.0
    %761 = vmatpush.msra.mxu0 0.0
    %762 = vmatpush.msra.mxu0 0.0
    %763 = vmatpush.msra.mxu0 0.0
    %764 = vmatpush.msra.mxu0 0.0
    %765 = vmatpush.msra.mxu0 0.0
    %766 = vmatpush.msra.mxu0 0.0
    %767 = vmatpush.msra.mxu0 0.0
    %768 = vmatpush.msra.mxu0 0.0
    %769 = vmatpush.msra.mxu0 0.0
    %770 = vmatpush.msra.mxu0 %v749
    %771 = vmatpush.msra.mxu0 %v748
    %772 = vmatpush.msra.mxu0 %v747
    %773 = vmatpush.msra.mxu0 %v746
    %774 = vmatmul.f32.gmra.mxu0 %v756
    %v775 = vpop.f32.mrf.mxu0
    %v776 = vadd.f32 %v753, %v775
    %777 = vdwg.mxu0
    %s778 = scalar_lea.vmem %s16, 4
    %v779 = vld [vmem:[%s778] sm:$0xf]
    %v780 = vadd.f32 %v586, %v776
    %v781 = vsel %vm459, %v780, 0.0
    %782 = vadd.xlane.f32.xlu0 %v781
    %v783 = vpop.xlane.xlu0 %782
    %v784 = vmul.f32 %v783, %v469
    %v785 = vsub.f32 %v780, %v784
    %v786 = vmul.f32 %v785, %v785
    %v787 = vsel %vm459, %v786, 0.0
    %788 = vadd.xlane.f32.xlu0 %v787
    %v789 = vpop.xlane.xlu0 %788
    %v790 = vmul.f32 %v789, %v469
    %v791 = vadd.f32 %v790, 1e-05
    %v792 = vrsqrt.pop %v791
    %v793 = vmul.f32 %v792, %v791
    %v794 = vmul.f32 %v793, %v792
    %v795 = vmul.f32 0.5, %v794
    %v796 = vsub.f32 1.5, %v795
    %v797 = vmul.f32 %v792, %v796
    %vm798 = vweird.f32 %v791
    %vm799 = vweird.f32 %v792
    %vm800 = vmor %vm798, %vm799
    %v801 = vsel %vm800, %v792, %v797
    %v802 = vmul.f32 %v785, %v801
    %v803 = vperm.slane %v779, 0
    %v804 = vmul.f32 %v802, %v803
    %v805 = vperm.slane %v779, 1
    %v806 = vadd.f32 %v804, %v805
    %s807 = scalar_lea.vmem [#allocation5], 32
    %v808 = vld [vmem:[%s807] sm:$0xff]
    %v809 = vld [vmem:[%s807 + $0x8] sm:$0xff]
    %v810 = vld [vmem:[%s807 + $0x10] sm:$0xff]
    %v811 = vld [vmem:[%s807 + $0x18] sm:$0xff]
    %s812 = scalar_lea.vmem %s13, 1
    %v813 = vld [vmem:[%s812] sm:$0x1]
    %v815 = vperm.slane %v813, 0
    %v818 = vsel %vm139, %v806, 0
    %820 = vmatpush.msra.mxu0 0.0
    %821 = vmatpush.msra.mxu0 0.0
    %822 = vmatpush.msra.mxu0 0.0
    %823 = vmatpush.msra.mxu0 0.0
    %824 = vmatpush.msra.mxu0 0.0
    %825 = vmatpush.msra.mxu0 0.0
    %826 = vmatpush.msra.mxu0 0.0
    %827 = vmatpush.msra.mxu0 0.0
    %828 = vmatpush.msra.mxu0 0.0
    %829 = vmatpush.msra.mxu0 0.0
    %830 = vmatpush.msra.mxu0 0.0
    %831 = vmatpush.msra.mxu0 0.0
    %832 = vmatpush.msra.mxu0 %v811
    %833 = vmatpush.msra.mxu0 %v810
    %834 = vmatpush.msra.mxu0 %v809
    %835 = vmatpush.msra.mxu0 %v808
    %836 = vmatmul.f32.gmra.mxu0 %v818
    %v837 = vpop.f32.mrf.mxu0
    %v838 = vadd.f32 %v815, %v837
    %839 = vdwg.mxu0
    %v840 = vmax.f32 %v838, 0.0
    %s841 = scalar_lea.vmem %s14, 64
    %v842 = vld [vmem:[%s841] sm:$0xff]
    %v843 = vld [vmem:[%s841 + $0x8] sm:$0xff]
    %v844 = vld [vmem:[%s841 + $0x10] sm:$0xff]
    %v845 = vld [vmem:[%s841 + $0x18] sm:$0xff]
    %v846 = vld [vmem:[%s841 + $0x20] sm:$0xff]
    %v847 = vld [vmem:[%s841 + $0x28] sm:$0xff]
    %v848 = vld [vmem:[%s841 + $0x30] sm:$0xff]
    %v849 = vld [vmem:[%s841 + $0x38] sm:$0xff]
    %s850 = scalar_lea.vmem %s15, 1
    %v851 = vld [vmem:[%s850] sm:$0x1]
    %v853 = vperm.slane %v851, 0
    %v856 = vsel %vm104, %v840, 0
    %858 = vmatpush.msra.mxu0 0.0
    %859 = vmatpush.msra.mxu0 0.0
    %860 = vmatpush.msra.mxu0 0.0
    %861 = vmatpush.msra.mxu0 0.0
    %862 = vmatpush.msra.mxu0 0.0
    %863 = vmatpush.msra.mxu0 0.0
    %864 = vmatpush.msra.mxu0 0.0
    %865 = vmatpush.msra.mxu0 0.0
    %866 = vmatpush.msra.mxu0 %v849
    %867 = vmatpush.msra.mxu0 %v848
    %868 = vmatpush.msra.mxu0 %v847
    %869 = vmatpush.msra.mxu0 %v846
    %870 = vmatpush.msra.mxu0 %v845
    %871 = vmatpush.msra.mxu0 %v844
    %872 = vmatpush.msra.mxu0 %v843
    %873 = vmatpush.msra.mxu0 %v842
    %874 = vmatmul.f32.gmra.mxu0 %v856
    %v875 = vpop.f32.mrf.mxu0
    %v876 = vadd.f32 %v853, %v875
    %877 = vdwg.mxu0
    %v878 = vadd.f32 %v806, %v876
    %v879 = vsel %vm459, %v878, 0.0
    %880 = vadd.xlane.f32.xlu0 %v879
    %v881 = vpop.xlane.xlu0 %880
    %v882 = vmul.f32 %v881, %v469
    %v883 = vsub.f32 %v878, %v882
    %v884 = vmul.f32 %v883, %v883
    %v885 = vsel %vm459, %v884, 0.0
    %886 = vadd.xlane.f32.xlu0 %v885
    %v887 = vpop.xlane.xlu0 %886
    %v888 = vmul.f32 %v887, %v469
    %v889 = vadd.f32 %v888, 1e-05
    %v890 = vrsqrt.pop %v889
    %v891 = vmul.f32 %v890, %v889
    %v892 = vmul.f32 %v891, %v890
    %v893 = vmul.f32 0.5, %v892
    %v894 = vsub.f32 1.5, %v893
    %v895 = vmul.f32 %v890, %v894
    %vm896 = vweird.f32 %v889
    %vm897 = vweird.f32 %v890
    %vm898 = vmor %vm896, %vm897
    %v899 = vsel %vm898, %v890, %v895
    %v900 = vmul.f32 %v883, %v899
    %v901 = vperm.slane %v779, 2
    %v902 = vmul.f32 %v900, %v901
    %v903 = vperm.slane %v779, 3
    %v904 = vadd.f32 %v902, %v903
    %v906 = vsel %vm286, %v251, 0
    %v909 = vsel %vm293, %v904, 0
    %911 = vmatpush.msra.mxu0 0.0
    %912 = vmatpush.msra.mxu0 0.0
    %913 = vmatpush.msra.mxu0 0.0
    %914 = vmatpush.msra.mxu0 0.0
    %915 = vmatpush.msra.mxu0 0.0
    %916 = vmatpush.msra.mxu0 0.0
    %917 = vmatpush.msra.mxu0 0.0
    %918 = vmatpush.msra.mxu0 0.0
    %919 = vmatpush.msra.mxu0 0.0
    %920 = vmatpush.msra.mxu0 0.0
    %921 = vmatpush.msra.mxu0 0.0
    %922 = vmatpush.msra.mxu0 0.0
    %923 = vmatpush.msra.mxu0 0.0
    %924 = vmatpush.msra.mxu0 0.0
    %925 = vmatpush.msra.mxu0 0.0
    %926 = vmatpush.msra.mxu0 %v909
    %927 = vmatmul.f32.gmra.mxu0 %v906
    %v928 = vpop.f32.mrf.mxu0
    %v929 = vadd.f32 0.0, %v928
    %930 = vdwg.mxu0
    %vm931 = vcmask 254976
    %932 = vst.msk [vmem:[#allocation7] sm:$0x3] %vm931, %v929
    // Predicated region
    $region78: #{fwd.1} parent=1 // pred_check
      _
    $region79: #{fwd.1} parent=1 // pred_check_branch
      %934 = sbr.rel (0) target = $region81
    $region80: #{fwd.1} parent=1 // pred_region
      _
    $region81: #{fwd.1} parent=1 // pred_fallthru
      _
    // Predicated region
    $region82: #{fwd.1} parent=1 // pred_check
      _
    $region83: #{fwd.1} parent=1 // pred_check_branch
      %936 = sbr.rel (0) target = $region85
    $region84: #{fwd.1} parent=1 // pred_region
      %938 = vsyncadd [#allocation4], 0
      %s940 = sshll.u32 [#allocation7], 4
      %s941 = int_to_ptr.vmem [resolvable:$true] %s940
      %s942 = sshll.u32 %s18, 4
      %s943 = int_to_ptr.hbm [resolvable:$true] %s942
      %945 = dma.vmem_to_hbm [thread:$0]  %s941, 32, %s943, [#allocation4]
    $region85: #{fwd.1} parent=1 // pred_fallthru
      _
    // Predicated region
    $region86: #{fwd.1} parent=1 // pred_check
      _
    $region87: #{fwd.1} parent=1 // pred_check_branch
      %947 = sbr.rel (0) target = $region89
    $region88: #{fwd.1} parent=1 // pred_region
      _
    $region89: #{fwd.1} parent=1 // pred_fallthru
      _
    // Predicated region
    $region90: #{fwd.1} parent=1 // pred_check
      _
    $region91: #{fwd.1} parent=1 // pred_check_branch
      %949 = sbr.rel (0) target = $region93
    $region92: #{fwd.1} parent=1 // pred_region
      %951 = dma.done [#allocation4], 32
    $region93: #{fwd.1} parent=1 // pred_fallthru
      _
    %952 = vsyncpa [#allocation3], 1
    %953 = vsyncpa [#allocation6], 1
    %954 = vsyncpa [#allocation4], 1

</llo_original>
